<compile_context>
chip_gen: v7x
topology: tpu7x:2x2x1
jax: 0.10.0
libtpu: 0.0.40
codegen_flags: <defaults>
</compile_context>

<pallas_src>
import numpy as np

import jax
import jax.numpy as jnp
from jax import lax
from jax.experimental import pallas as pl
from jax.experimental.pallas import tpu as pltpu


# ----------------------------------------------------------------------------- kernel

def _conv3x3_rows(inp, w_ref, s0, s2, sb):
    """One Conv3x3(pad=1, no bias) + BN(eval) + ReLU on row-flattened activations.

    inp:   (M, K)   compute dtype   NB images x 2H rows flattened on sublanes, (W,C) on lanes
    w_ref: (3, K, L) ref            per-row-tap Toeplitz weights (dw taps / W pad / column
                                    upsample / channel concat pre-folded on the lane axis)
    s0,s2: (M, M)   compute dtype   exact 0/1 block-diagonal row-shift operators (taps dh=0/2;
                                    zero rows implement the H zero padding per image)
    sb:    (2, L)   f32             row 0: BN scale (lane-tiled), row 1: BN bias (lane-tiled)
    """
    cdt = inp.dtype
    acc = jnp.dot(inp, w_ref[1], preferred_element_type=jnp.float32)        # dh=1: no shift
    up = jnp.dot(s0, inp, preferred_element_type=jnp.float32).astype(cdt)   # row above (dh=0)
    acc += jnp.dot(up, w_ref[0], preferred_element_type=jnp.float32)
    dn = jnp.dot(s2, inp, preferred_element_type=jnp.float32).astype(cdt)   # row below (dh=2)
    acc += jnp.dot(dn, w_ref[2], preferred_element_type=jnp.float32)
    return jnp.maximum(acc * sb[0:1, :] + sb[1:2, :], 0.0)


def _decoder_block_kernel(cat_ref, s0_ref, s2_ref, w1_ref, w2_ref, sb1_ref, sb2_ref, o_ref):
    """Fused DecoderBlock forward for one block of NB batch images.

    cat_ref: (M, K1)      bf16   [row-upsampled x | skip], M = NB*2H, K1 = W*Cin + 2W*Cskip
    s0_ref:  (M, M)       bf16   row-shift operator, tap dh=0
    s2_ref:  (M, M)       bf16   row-shift operator, tap dh=2
    w1_ref:  (3, K1, L)   bf16   conv1 Toeplitz weights per row tap (x/skip K-fused)
    w2_ref:  (3, L,  L)   bf16   conv2 Toeplitz weights per row tap
    sb1_ref: (2, L)       f32    BN1 scale / bias, lane-tiled
    sb2_ref: (2, L)       f32    BN2 scale / bias, lane-tiled
    o_ref:   (M, L)              lane-dense output (L = 2W*Cout)
    """
    cdt = cat_ref.dtype
    s0 = s0_ref[...]
    s2 = s2_ref[...]
    # conv1 + BN1 + ReLU; the activation stays in VMEM/vregs, cast to bf16 exactly once.
    h1 = _conv3x3_rows(cat_ref[...], w1_ref, s0, s2, sb1_ref[...]).astype(cdt)
    # conv2 + BN2 + ReLU.
    out = _conv3x3_rows(h1, w2_ref, s0, s2, sb2_ref[...])
    o_ref[...] = out.astype(o_ref.dtype)


# ----------------------------------------------------------------------------- wrapper helpers

def _fold_bn(gamma, beta, mean, var, eps=1e-5):
    scale = gamma / jnp.sqrt(var + eps)
    return scale, beta - mean * scale


def _col_select_upsample(w_in, w_out):
    """S[dw, j, w] = 1 iff conv tap dw of output column w reads pre-upsample input column j
    (3-tap conv, padding=1, applied after x2 nearest upsample along W)."""
    s = np.zeros((3, w_in, w_out), np.float32)
    for w in range(w_out):
        for dw in range(3):
            q = w + dw                       # column in the zero-padded upsampled frame
            if 1 <= q <= w_out:
                s[dw, (q - 1) // 2, w] = 1.0
    return s


def _col_select_same(w_out):
    """S[dw, j, w] = 1 iff conv tap dw of output column w reads input column j (padding=1)."""
    s = np.zeros((3, w_out, w_out), np.float32)
    for w in range(w_out):
        for dw in range(3):
            q = w + dw
            if 1 <= q <= w_out:
                s[dw, q - 1, w] = 1.0
    return s


def _row_shift_ops(nb, h2, dtype):
    """Exact 0/1 block-diagonal row-shift operators for taps dh=0 (row above) and dh=2
    (row below).  Zero rows at image boundaries implement the H zero padding, and the
    block-diagonal structure stops shifts from bleeding across packed batch images."""
    m = nb * h2
    s0 = np.zeros((m, m), np.float32)
    s2 = np.zeros((m, m), np.float32)
    for n in range(nb):
        for q in range(h2):
            if q >= 1:
                s0[n * h2 + q, n * h2 + q - 1] = 1.0
            if q + 1 < h2:
                s2[n * h2 + q, n * h2 + q + 1] = 1.0
    return jnp.asarray(s0, dtype), jnp.asarray(s2, dtype)


def _build_weights(params, in_ch, skip_ch, W, compute_dtype):
    """Fold the dw taps / W zero padding / column half of the x2 upsample / x-skip channel
    concat into per-row-tap matrices acting on the lane-flattened (W*C) axis.  BN scale/bias
    are NOT folded into the (bf16) weights; they are returned as lane-tiled f32 (2, L)."""
    Cout = params["w1"].shape[-1]
    W2 = 2 * W
    s1, b1 = _fold_bn(params["g1"], params["beta1"], params["rm1"], params["rv1"])
    s2, b2 = _fold_bn(params["g2"], params["beta2"], params["rm2"], params["rv2"])
    k1 = params["w1"]                         # (3, 3, Cin+Cskip, Cout) HWIO
    k2 = params["w2"]                         # (3, 3, Cout, Cout)
    k1x, k1s = k1[:, :, :in_ch, :], k1[:, :, in_ch:, :]

    sx = jnp.asarray(_col_select_upsample(W, W2))     # (3, W,  W2)  x part (col upsample)
    ss = jnp.asarray(_col_select_same(W2))            # (3, W2, W2)  skip / conv2 part
    hi = lax.Precision.HIGHEST
    mx = jnp.einsum("djw,hdco->hjcwo", sx, k1x, precision=hi).reshape(3, W * in_ch, W2 * Cout)
    ms = jnp.einsum("djw,hdco->hjcwo", ss, k1s, precision=hi).reshape(3, W2 * skip_ch, W2 * Cout)
    w1 = jnp.concatenate([mx, ms], axis=1)             # (3, K1, L): x/skip K-fused (1 matmul/tap)
    w2 = jnp.einsum("djw,hdco->hjcwo", ss, k2, precision=hi).reshape(3, W2 * Cout, W2 * Cout)
    sb1 = jnp.stack([jnp.tile(s1, W2), jnp.tile(b1, W2)]).astype(jnp.float32)   # (2, L)
    sb2 = jnp.stack([jnp.tile(s2, W2), jnp.tile(b2, W2)]).astype(jnp.float32)   # (2, L)
    return w1.astype(compute_dtype), w2.astype(compute_dtype), sb1, sb2


def _pick_nb(n, h2, target_rows=128):
    """Largest NB <= target_rows/2H that divides N and keeps NB*2H sublane-aligned.
    NOTE(v7x): at large N this leaves >=2 'parallel' grid steps so both TensorCores get
    work; at tiny N we prefer MXU row fill over core count (callers may pass nb=...)."""
    want = max(1, target_rows // h2)
    for nb in range(min(n, want), 0, -1):
        if n % nb == 0 and (nb == n or (nb * h2) % 8 == 0):
            return nb
    return n


# ----------------------------------------------------------------------------- forward

def decoder_block_forward(x, skip, params, compute_dtype=jnp.bfloat16,
                          out_dtype=jnp.float32, nb=None):
    """x: (N, Cin, H, W) NCHW; skip: (N, Cskip, 2H, 2W) NCHW. Returns (N, Cout, 2H, 2W).
    Pass out_dtype=jnp.bfloat16 to halve output writeback if the consumer allows."""
    if skip is None:
        # TODO(synk): skip=None (skip_channels=0) path not implemented.
        raise NotImplementedError("skip=None path not implemented")
    N, Cin, H, W = x.shape
    Cskip = skip.shape[1]
    Cout = params["w1"].shape[-1]
    H2, W2 = 2 * H, 2 * W
    K1 = W * Cin + W2 * Cskip
    L = W2 * Cout                       # keep a multiple of 128 for full-lane stores

    # Batch packing: NB images per grid step -> matmul M dimension = NB*2H.
    if nb is None:
        nb = _pick_nb(N, H2)
    assert N % nb == 0, (N, nb)
    M = nb * H2
    G = N // nb

    w1, w2, sb1, sb2 = _build_weights(params, Cin, Cskip, W, compute_dtype)
    s0, s2m = _row_shift_ops(nb, H2, compute_dtype)

    # Layout plumbing (wrapper side): NCHW -> NHWC -> (W, C) flattened on lanes; nearest row
    # upsample of x (pure row duplication, exact); lane-concat with skip; flatten (N, 2H)
    # rows onto the sublane axis so each grid block is a dense (M, K1) slab.
    x2d = jnp.transpose(x, (0, 2, 3, 1)).reshape(N, H, W * Cin)
    xup = jnp.repeat(x2d, 2, axis=1)                                    # (N, 2H, W*Cin)
    s2d = jnp.transpose(skip, (0, 2, 3, 1)).reshape(N, H2, W2 * Cskip)
    cat = jnp.concatenate([xup, s2d], axis=-1).astype(compute_dtype).reshape(N * H2, K1)

    cbytes = jnp.dtype(compute_dtype).itemsize
    obytes = jnp.dtype(out_dtype).itemsize
    flops = G * 2 * M * (3 * K1 * L + 3 * L * L + 2 * M * K1 + 2 * M * L)
    bytes_accessed = (N * H2 * K1 * cbytes + N * H2 * L * obytes
                      + (3 * K1 * L + 3 * L * L + 2 * M * M) * cbytes + 4 * L * 4)

    out_flat = pl.pallas_call(
        _decoder_block_kernel,
        out_shape=jax.ShapeDtypeStruct((N * H2, L), out_dtype),
        grid_spec=pltpu.PrefetchScalarGridSpec(
            num_scalar_prefetch=0,
            grid=(G,),
            in_specs=[
                pl.BlockSpec((M, K1), lambda g: (g, 0)),
                pl.BlockSpec((M, M), lambda g: (0, 0)),
                pl.BlockSpec((M, M), lambda g: (0, 0)),
                pl.BlockSpec((3, K1, L), lambda g: (0, 0, 0)),
                pl.BlockSpec((3, L, L), lambda g: (0, 0, 0)),
                pl.BlockSpec((2, L), lambda g: (0, 0)),
                pl.BlockSpec((2, L), lambda g: (0, 0)),
            ],
            out_specs=pl.BlockSpec((M, L), lambda g: (g, 0)),
        ),
        compiler_params=pltpu.CompilerParams(
            dimension_semantics=("parallel",),
            vmem_limit_bytes=64 * 1024 * 1024),
        cost_estimate=pl.CostEstimate(flops=flops, transcendentals=0,
                                      bytes_accessed=bytes_accessed),
    )(cat, s0, s2m, w1, w2, sb1, sb2)

    # Lane-dense (N*2H, 2W*Cout) -> NCHW (layout plumbing only).
    return jnp.transpose(out_flat.reshape(N, H2, W2, Cout), (0, 3, 1, 2))


# ----------------------------------------------------------------------------- references

def _flat_reference(cat, s0, s2, w1, w2, sb1, sb2, block_rows):
    """Pure-JAX mirror of the fused kernel math (same dtypes / op order; validates lowering)."""
    hi = lax.Precision.HIGHEST
    G = cat.shape[0] // block_rows
    inp = cat.reshape(G, block_rows, cat.shape[-1])

    def conv(a, w, sb):
        acc = jnp.einsum("gmk,kl->gml", a, w[1], precision=hi,
                         preferred_element_type=jnp.float32)
        up = jnp.einsum("rm,gmk->grk", s0, a, precision=hi,
                        preferred_element_type=jnp.float32).astype(a.dtype)
        acc += jnp.einsum("gmk,kl->gml", up, w[0], precision=hi,
                          preferred_element_type=jnp.float32)
        dn = jnp.einsum("rm,gmk->grk", s2, a, precision=hi,
                        preferred_element_type=jnp.float32).astype(a.dtype)
        acc += jnp.einsum("gmk,kl->gml", dn, w[2], precision=hi,
                          preferred_element_type=jnp.float32)
        return jnp.maximum(acc * sb[0][None, None, :] + sb[1][None, None, :], 0.0)

    h1 = conv(inp, w1, sb1).astype(cat.dtype)
    out = conv(h1, w2, sb2)
    return out.reshape(cat.shape[0], -1)


def _module_reference(x, skip, params):
    """Pure fp32 JAX reference of the PyTorch DecoderBlock (eval-mode BN, Identity attn)."""
    s1, b1 = _fold_bn(params["g1"], params["beta1"], params["rm1"], params["rv1"])
    s2, b2 = _fold_bn(params["g2"], params["beta2"], params["rm2"], params["rv2"])
    x = jnp.repeat(jnp.repeat(x, 2, axis=2), 2, axis=3)
    x = jnp.concatenate([x, skip], axis=1)

    def cbr(x_nchw, w_hwio, scale, bias):
        w_oihw = jnp.transpose(w_hwio, (3, 2, 0, 1))
        y = lax.conv_general_dilated(
            x_nchw, w_oihw, window_strides=(1, 1), padding=((1, 1), (1, 1)),
            dimension_numbers=("NCHW", "OIHW", "NCHW"),
            precision=lax.Precision.HIGHEST)
        return jnp.maximum(y * scale[None, :, None, None] + bias[None, :, None, None], 0.0)

    x = cbr(x, params["w1"], s1, b1)
    return cbr(x, params["w2"], s2, b2)


# ----------------------------------------------------------------------------- test

if __name__ == "__main__":
    # Module config: in_channels=4, skip_channels=4, out_channels=8,
    # attention_type=None, dilation_rate=1.
    in_ch, skip_ch, out_ch = 4, 4, 8
    N, H, W = 2, 8, 8                     # x spatial; skip / output are (2H, 2W) = (16, 16)
    H2, W2 = 2 * H, 2 * W

    key = jax.random.PRNGKey(0)
    k = jax.random.split(key, 12)

    x = jax.random.normal(k[0], (N, in_ch, H, W), jnp.float32)
    skip = jax.random.normal(k[1], (N, skip_ch, H2, W2), jnp.float32)

    c1_in = in_ch + skip_ch
    params = {
        # Conv weights stored HWIO (3, 3, Cin, Cout).
        "w1": jax.random.normal(k[2], (3, 3, c1_in, out_ch), jnp.float32) * 0.1,
        "w2": jax.random.normal(k[3], (3, 3, out_ch, out_ch), jnp.float32) * 0.1,
        # BatchNorm (eval mode) parameters / running statistics.
        "g1": 1.0 + 0.1 * jax.random.normal(k[4], (out_ch,), jnp.float32),
        "beta1": 0.1 * jax.random.normal(k[5], (out_ch,), jnp.float32),
        "rm1": 0.1 * jax.random.normal(k[6], (out_ch,), jnp.float32),
        "rv1": 1.0 + 0.1 * jax.random.uniform(k[7], (out_ch,), jnp.float32),
        "g2": 1.0 + 0.1 * jax.random.normal(k[8], (out_ch,), jnp.float32),
        "beta2": 0.1 * jax.random.normal(k[9], (out_ch,), jnp.float32),
        "rm2": 0.1 * jax.random.normal(k[10], (out_ch,), jnp.float32),
        "rv2": 1.0 + 0.1 * jax.random.uniform(k[11], (out_ch,), jnp.float32),
    }

    out = jax.jit(decoder_block_forward)(x, skip, params)
    out = jax.block_until_ready(out)
    assert out.shape == (N, out_ch, H2, W2), out.shape

    nb = _pick_nb(N, H2)
    M = nb * H2

    def prep(dtype):
        # Mirrors the wrapper's layout plumbing.
        x2d = jnp.transpose(x, (0, 2, 3, 1)).reshape(N, H, W * in_ch)
        xup = jnp.repeat(x2d, 2, axis=1)
        s2d = jnp.transpose(skip, (0, 2, 3, 1)).reshape(N, H2, W2 * skip_ch)
        return jnp.concatenate([xup, s2d], axis=-1).astype(dtype).reshape(N * H2, -1)

    # (1) Validate the Toeplitz / shift-op / upsample fold construction (fp32) vs the module.
    w1f, w2f, sb1f, sb2f = _build_weights(params, in_ch, skip_ch, W, jnp.float32)
    s0f, s2f = _row_shift_ops(nb, H2, jnp.float32)
    flat32 = _flat_reference(prep(jnp.float32), s0f, s2f, w1f, w2f, sb1f, sb2f, M)
    ref32 = _module_reference(x, skip, params)
    ref32_flat = jnp.transpose(ref32, (0, 2, 3, 1)).reshape(N * H2, W2 * out_ch)
    err_construction = float(jnp.max(jnp.abs(flat32 - ref32_flat)))
    assert err_construction < 1e-4, err_construction

    # (2) Validate the Pallas kernel vs the bf16-matched pure-JAX mirror of the same math.
    w1b, w2b, sb1b, sb2b = _build_weights(params, in_ch, skip_ch, W, jnp.bfloat16)
    s0b, s2b = _row_shift_ops(nb, H2, jnp.bfloat16)
    flat16 = _flat_reference(prep(jnp.bfloat16), s0b, s2b, w1b, w2b, sb1b, sb2b, M)
    out_flat = jnp.transpose(out, (0, 2, 3, 1)).reshape(N * H2, W2 * out_ch)
    err_kernel = float(jnp.max(jnp.abs(out_flat - flat16.astype(jnp.float32))))
    assert err_kernel < 2e-3, err_kernel

    print("KERNEL_OK")
</pallas_src>

<mosaic_0001>
module attributes {stable_mosaic.version = 11 : i64} {
  func.func @_decoder_block_kernel(%arg0: i32, %arg1: memref<32x96xbf16, #tpu.memory_space<vmem>>, %arg2: memref<32x32xbf16, #tpu.memory_space<vmem>>, %arg3: memref<32x32xbf16, #tpu.memory_space<vmem>>, %arg4: memref<3x96x128xbf16, #tpu.memory_space<vmem>>, %arg5: memref<3x128x128xbf16, #tpu.memory_space<vmem>>, %arg6: memref<2x128xf32, #tpu.memory_space<vmem>>, %arg7: memref<2x128xf32, #tpu.memory_space<vmem>>, %arg8: memref<32x128xf32, #tpu.memory_space<vmem>>) attributes {dimension_semantics = [#tpu.dimension_semantics<parallel>], iteration_bounds = array<i64: 1>, scalar_prefetch = 0 : i64, scratch_operands = 0 : i64, tpu.core_type = #tpu.core_type<tc>, window_params = [{transform_indices = @transform_0, window_bounds = array<i64: 32, 96>}, {pipeline_mode = #tpu.pipeline_mode<synchronous>, transform_indices = @transform_1, window_bounds = array<i64: 32, 32>}, {pipeline_mode = #tpu.pipeline_mode<synchronous>, transform_indices = @transform_2, window_bounds = array<i64: 32, 32>}, {pipeline_mode = #tpu.pipeline_mode<synchronous>, transform_indices = @transform_3, window_bounds = array<i64: 3, 96, 128>}, {pipeline_mode = #tpu.pipeline_mode<synchronous>, transform_indices = @transform_4, window_bounds = array<i64: 3, 128, 128>}, {pipeline_mode = #tpu.pipeline_mode<synchronous>, transform_indices = @transform_5, window_bounds = array<i64: 2, 128>}, {pipeline_mode = #tpu.pipeline_mode<synchronous>, transform_indices = @transform_6, window_bounds = array<i64: 2, 128>}, {transform_indices = @transform_7, window_bounds = array<i64: 32, 128>}]} {
    %c0 = arith.constant 0 : index
    %c0_0 = arith.constant 0 : index
    %0 = vector.load %arg2[%c0, %c0_0] : memref<32x32xbf16, #tpu.memory_space<vmem>>, vector<32x32xbf16>
    %c0_1 = arith.constant 0 : index
    %c0_2 = arith.constant 0 : index
    %1 = vector.load %arg3[%c0_1, %c0_2] : memref<32x32xbf16, #tpu.memory_space<vmem>>, vector<32x32xbf16>
    %c0_3 = arith.constant 0 : index
    %c0_4 = arith.constant 0 : index
    %2 = vector.load %arg1[%c0_3, %c0_4] : memref<32x96xbf16, #tpu.memory_space<vmem>>, vector<32x96xbf16>
    %c0_5 = arith.constant 0 : index
    %c0_6 = arith.constant 0 : index
    %3 = vector.load %arg6[%c0_5, %c0_6] : memref<2x128xf32, #tpu.memory_space<vmem>>, vector<2x128xf32>
    %c1 = arith.constant 1 : index
    %c0_7 = arith.constant 0 : index
    %c0_8 = arith.constant 0 : index
    %4 = vector.load %arg4[%c1, %c0_7, %c0_8] : memref<3x96x128xbf16, #tpu.memory_space<vmem>>, vector<1x96x128xbf16>
    %5 = vector.shape_cast %4 : vector<1x96x128xbf16> to vector<96x128xbf16>
    %cst = arith.constant dense<0.000000e+00> : vector<32x128xf32>
    %6 = tpu.matmul %2, %5, %cst {dimension_numbers = #tpu.dot_dimension_numbers<[1], [0], [0], [1], [0, 0, 1, 1], [], []>} : vector<32x96xbf16>, vector<96x128xbf16>, vector<32x128xf32> -> vector<32x128xf32>
    %cst_9 = arith.constant dense<0.000000e+00> : vector<32x96xf32>
    %7 = tpu.matmul %0, %2, %cst_9 {dimension_numbers = #tpu.dot_dimension_numbers<[1], [0], [0], [1], [0, 0, 1, 1], [], []>} : vector<32x32xbf16>, vector<32x96xbf16>, vector<32x96xf32> -> vector<32x96xf32>
    %8 = arith.truncf %7 : vector<32x96xf32> to vector<32x96xbf16>
    %c0_10 = arith.constant 0 : index
    %c0_11 = arith.constant 0 : index
    %c0_12 = arith.constant 0 : index
    %9 = vector.load %arg4[%c0_10, %c0_11, %c0_12] : memref<3x96x128xbf16, #tpu.memory_space<vmem>>, vector<1x96x128xbf16>
    %10 = vector.shape_cast %9 : vector<1x96x128xbf16> to vector<96x128xbf16>
    %cst_13 = arith.constant dense<0.000000e+00> : vector<32x128xf32>
    %11 = tpu.matmul %8, %10, %cst_13 {dimension_numbers = #tpu.dot_dimension_numbers<[1], [0], [0], [1], [0, 0, 1, 1], [], []>} : vector<32x96xbf16>, vector<96x128xbf16>, vector<32x128xf32> -> vector<32x128xf32>
    %12 = arith.addf %6, %11 : vector<32x128xf32>
    %cst_14 = arith.constant dense<0.000000e+00> : vector<32x96xf32>
    %13 = tpu.matmul %1, %2, %cst_14 {dimension_numbers = #tpu.dot_dimension_numbers<[1], [0], [0], [1], [0, 0, 1, 1], [], []>} : vector<32x32xbf16>, vector<32x96xbf16>, vector<32x96xf32> -> vector<32x96xf32>
    %14 = arith.truncf %13 : vector<32x96xf32> to vector<32x96xbf16>
    %c2 = arith.constant 2 : index
    %c0_15 = arith.constant 0 : index
    %c0_16 = arith.constant 0 : index
    %15 = vector.load %arg4[%c2, %c0_15, %c0_16] : memref<3x96x128xbf16, #tpu.memory_space<vmem>>, vector<1x96x128xbf16>
    %16 = vector.shape_cast %15 : vector<1x96x128xbf16> to vector<96x128xbf16>
    %cst_17 = arith.constant dense<0.000000e+00> : vector<32x128xf32>
    %17 = tpu.matmul %14, %16, %cst_17 {dimension_numbers = #tpu.dot_dimension_numbers<[1], [0], [0], [1], [0, 0, 1, 1], [], []>} : vector<32x96xbf16>, vector<96x128xbf16>, vector<32x128xf32> -> vector<32x128xf32>
    %18 = arith.addf %12, %17 : vector<32x128xf32>
    %19 = vector.extract_strided_slice %3 {offsets = [0, 0], sizes = [1, 128], strides = [1, 1]} : vector<2x128xf32> to vector<1x128xf32>
    %20 = vector.broadcast %19 : vector<1x128xf32> to vector<32x128xf32>
    %21 = arith.mulf %18, %20 : vector<32x128xf32>
    %22 = vector.extract_strided_slice %3 {offsets = [1, 0], sizes = [1, 128], strides = [1, 1]} : vector<2x128xf32> to vector<1x128xf32>
    %23 = vector.broadcast %22 : vector<1x128xf32> to vector<32x128xf32>
    %24 = arith.addf %21, %23 : vector<32x128xf32>
    %cst_18 = arith.constant 0.000000e+00 : f32
    %25 = vector.broadcast %cst_18 : f32 to vector<32x128xf32>
    %26 = arith.maximumf %24, %25 : vector<32x128xf32>
    %27 = arith.truncf %26 : vector<32x128xf32> to vector<32x128xbf16>
    %c0_19 = arith.constant 0 : index
    %c0_20 = arith.constant 0 : index
    %28 = vector.load %arg7[%c0_19, %c0_20] : memref<2x128xf32, #tpu.memory_space<vmem>>, vector<2x128xf32>
    %c1_21 = arith.constant 1 : index
    %c0_22 = arith.constant 0 : index
    %c0_23 = arith.constant 0 : index
    %29 = vector.load %arg5[%c1_21, %c0_22, %c0_23] : memref<3x128x128xbf16, #tpu.memory_space<vmem>>, vector<1x128x128xbf16>
    %30 = vector.shape_cast %29 : vector<1x128x128xbf16> to vector<128x128xbf16>
    %cst_24 = arith.constant dense<0.000000e+00> : vector<32x128xf32>
    %31 = tpu.matmul %27, %30, %cst_24 {dimension_numbers = #tpu.dot_dimension_numbers<[1], [0], [0], [1], [0, 0, 1, 1], [], []>} : vector<32x128xbf16>, vector<128x128xbf16>, vector<32x128xf32> -> vector<32x128xf32>
    %cst_25 = arith.constant dense<0.000000e+00> : vector<32x128xf32>
    %32 = tpu.matmul %0, %27, %cst_25 {dimension_numbers = #tpu.dot_dimension_numbers<[1], [0], [0], [1], [0, 0, 1, 1], [], []>} : vector<32x32xbf16>, vector<32x128xbf16>, vector<32x128xf32> -> vector<32x128xf32>
    %33 = arith.truncf %32 : vector<32x128xf32> to vector<32x128xbf16>
    %c0_26 = arith.constant 0 : index
    %c0_27 = arith.constant 0 : index
    %c0_28 = arith.constant 0 : index
    %34 = vector.load %arg5[%c0_26, %c0_27, %c0_28] : memref<3x128x128xbf16, #tpu.memory_space<vmem>>, vector<1x128x128xbf16>
    %35 = vector.shape_cast %34 : vector<1x128x128xbf16> to vector<128x128xbf16>
    %cst_29 = arith.constant dense<0.000000e+00> : vector<32x128xf32>
    %36 = tpu.matmul %33, %35, %cst_29 {dimension_numbers = #tpu.dot_dimension_numbers<[1], [0], [0], [1], [0, 0, 1, 1], [], []>} : vector<32x128xbf16>, vector<128x128xbf16>, vector<32x128xf32> -> vector<32x128xf32>
    %37 = arith.addf %31, %36 : vector<32x128xf32>
    %cst_30 = arith.constant dense<0.000000e+00> : vector<32x128xf32>
    %38 = tpu.matmul %1, %27, %cst_30 {dimension_numbers = #tpu.dot_dimension_numbers<[1], [0], [0], [1], [0, 0, 1, 1], [], []>} : vector<32x32xbf16>, vector<32x128xbf16>, vector<32x128xf32> -> vector<32x128xf32>
    %39 = arith.truncf %38 : vector<32x128xf32> to vector<32x128xbf16>
    %c2_31 = arith.constant 2 : index
    %c0_32 = arith.constant 0 : index
    %c0_33 = arith.constant 0 : index
    %40 = vector.load %arg5[%c2_31, %c0_32, %c0_33] : memref<3x128x128xbf16, #tpu.memory_space<vmem>>, vector<1x128x128xbf16>
    %41 = vector.shape_cast %40 : vector<1x128x128xbf16> to vector<128x128xbf16>
    %cst_34 = arith.constant dense<0.000000e+00> : vector<32x128xf32>
    %42 = tpu.matmul %39, %41, %cst_34 {dimension_numbers = #tpu.dot_dimension_numbers<[1], [0], [0], [1], [0, 0, 1, 1], [], []>} : vector<32x128xbf16>, vector<128x128xbf16>, vector<32x128xf32> -> vector<32x128xf32>
    %43 = arith.addf %37, %42 : vector<32x128xf32>
    %44 = vector.extract_strided_slice %28 {offsets = [0, 0], sizes = [1, 128], strides = [1, 1]} : vector<2x128xf32> to vector<1x128xf32>
    %45 = vector.broadcast %44 : vector<1x128xf32> to vector<32x128xf32>
    %46 = arith.mulf %43, %45 : vector<32x128xf32>
    %47 = vector.extract_strided_slice %28 {offsets = [1, 0], sizes = [1, 128], strides = [1, 1]} : vector<2x128xf32> to vector<1x128xf32>
    %48 = vector.broadcast %47 : vector<1x128xf32> to vector<32x128xf32>
    %49 = arith.addf %46, %48 : vector<32x128xf32>
    %cst_35 = arith.constant 0.000000e+00 : f32
    %50 = vector.broadcast %cst_35 : f32 to vector<32x128xf32>
    %51 = arith.maximumf %49, %50 : vector<32x128xf32>
    %c0_36 = arith.constant 0 : index
    %c0_37 = arith.constant 0 : index
    %52 = vector.load %arg8[%c0_36, %c0_37] : memref<32x128xf32, #tpu.memory_space<vmem>>, vector<32x128xf32>
    tpu.vector_store %arg8[%c0_36, %c0_37], %51 {strides = array<i32>} : memref<32x128xf32, #tpu.memory_space<vmem>>, vector<32x128xf32>,
    return
  }
  func.func @transform_0(%arg0: i32) -> (i32, i32) {
    %c0_i32 = arith.constant 0 : i32
    %c0_i32_0 = arith.constant 0 : i32
    return %arg0, %c0_i32 : i32, i32
  }
  func.func @transform_1(%arg0: i32) -> (i32, i32) {
    %c0_i32 = arith.constant 0 : i32
    %c0_i32_0 = arith.constant 0 : i32
    %c0_i32_1 = arith.constant 0 : i32
    return %c0_i32, %c0_i32_0 : i32, i32
  }
  func.func @transform_2(%arg0: i32) -> (i32, i32) {
    %c0_i32 = arith.constant 0 : i32
    %c0_i32_0 = arith.constant 0 : i32
    %c0_i32_1 = arith.constant 0 : i32
    return %c0_i32, %c0_i32_0 : i32, i32
  }
  func.func @transform_3(%arg0: i32) -> (i32, i32, i32) {
    %c0_i32 = arith.constant 0 : i32
    %c0_i32_0 = arith.constant 0 : i32
    %c0_i32_1 = arith.constant 0 : i32
    %c0_i32_2 = arith.constant 0 : i32
    return %c0_i32, %c0_i32_0, %c0_i32_1 : i32, i32, i32
  }
  func.func @transform_4(%arg0: i32) -> (i32, i32, i32) {
    %c0_i32 = arith.constant 0 : i32
    %c0_i32_0 = arith.constant 0 : i32
    %c0_i32_1 = arith.constant 0 : i32
    %c0_i32_2 = arith.constant 0 : i32
    return %c0_i32, %c0_i32_0, %c0_i32_1 : i32, i32, i32
  }
  func.func @transform_5(%arg0: i32) -> (i32, i32) {
    %c0_i32 = arith.constant 0 : i32
    %c0_i32_0 = arith.constant 0 : i32
    %c0_i32_1 = arith.constant 0 : i32
    return %c0_i32, %c0_i32_0 : i32, i32
  }
  func.func @transform_6(%arg0: i32) -> (i32, i32) {
    %c0_i32 = arith.constant 0 : i32
    %c0_i32_0 = arith.constant 0 : i32
    %c0_i32_1 = arith.constant 0 : i32
    return %c0_i32, %c0_i32_0 : i32, i32
  }
  func.func @transform_7(%arg0: i32) -> (i32, i32) {
    %c0_i32 = arith.constant 0 : i32
    %c0_i32_0 = arith.constant 0 : i32
    return %arg0, %c0_i32 : i32, i32
  }
}

</mosaic_0001>

<llo_original>
// kernel: tile.28
$region0: #{tile.28}
  %s0 = inlined_call_operand.vmem [shape: f32[16,8], index: 0, kind: input, shape index: {}]
  %s1 = inlined_call_operand.vmem [shape: f32[1,128], index: 1, kind: output, shape index: {}]
  $region1: #{tile.28} parent=0
    #allocation0 [shape = 'u8[4096]{0}', space=vmem, size = 0x1000, scoped, tag = 'scoped mem for output reshape']
    %v2 = vld [vmem:[%s0] sm:$0x1]
    %vm3 = vcmask 64512
    %4 = vst.msk [vmem:[#allocation0] sm:$0x1] %vm3, %v2
    %s5 = scalar_lea.vmem %s0, 15
    %v6 = vld [vmem:[%s5] sm:$0x1]
    %7 = vrot.lane.b32.xlu0 %v6, 120
    %v8 = vpop.permute.xlu0 %7
    %vm9 = vcmask 1048512
    %10 = vst.msk [vmem:[#allocation0] sm:$0x1] %vm9, %v8
    %s11 = scalar_lea.vmem %s0, 14
    %v12 = vld [vmem:[%s11] sm:$0x1]
    %13 = vrot.lane.b32.xlu0 %v12, 112
    %v14 = vpop.permute.xlu0 %13
    %vm15 = vcmask 982912
    %16 = vst.msk [vmem:[#allocation0] sm:$0x1] %vm15, %v14
    %s17 = scalar_lea.vmem %s0, 13
    %v18 = vld [vmem:[%s17] sm:$0x1]
    %19 = vrot.lane.b32.xlu0 %v18, 104
    %v20 = vpop.permute.xlu0 %19
    %vm21 = vcmask 917312
    %22 = vst.msk [vmem:[#allocation0] sm:$0x1] %vm21, %v20
    %s23 = scalar_lea.vmem %s0, 12
    %v24 = vld [vmem:[%s23] sm:$0x1]
    %25 = vrot.lane.b32.xlu0 %v24, 96
    %v26 = vpop.permute.xlu0 %25
    %vm27 = vcmask 851712
    %28 = vst.msk [vmem:[#allocation0] sm:$0x1] %vm27, %v26
    %s29 = scalar_lea.vmem %s0, 11
    %v30 = vld [vmem:[%s29] sm:$0x1]
    %31 = vrot.lane.b32.xlu0 %v30, 88
    %v32 = vpop.permute.xlu0 %31
    %vm33 = vcmask 786112
    %34 = vst.msk [vmem:[#allocation0] sm:$0x1] %vm33, %v32
    %s35 = scalar_lea.vmem %s0, 10
    %v36 = vld [vmem:[%s35] sm:$0x1]
    %37 = vrot.lane.b32.xlu0 %v36, 80
    %v38 = vpop.permute.xlu0 %37
    %vm39 = vcmask 720512
    %40 = vst.msk [vmem:[#allocation0] sm:$0x1] %vm39, %v38
    %s41 = scalar_lea.vmem %s0, 9
    %v42 = vld [vmem:[%s41] sm:$0x1]
    %43 = vrot.lane.b32.xlu0 %v42, 72
    %v44 = vpop.permute.xlu0 %43
    %vm45 = vcmask 654912
    %46 = vst.msk [vmem:[#allocation0] sm:$0x1] %vm45, %v44
    %s47 = scalar_lea.vmem %s0, 8
    %v48 = vld [vmem:[%s47] sm:$0x1]
    %49 = vrot.lane.b32.xlu0 %v48, 64
    %v50 = vpop.permute.xlu0 %49
    %vm51 = vcmask 589312
    %52 = vst.msk [vmem:[#allocation0] sm:$0x1] %vm51, %v50
    %s53 = scalar_lea.vmem %s0, 7
    %v54 = vld [vmem:[%s53] sm:$0x1]
    %55 = vrot.lane.b32.xlu0 %v54, 56
    %v56 = vpop.permute.xlu0 %55
    %vm57 = vcmask 523712
    %58 = vst.msk [vmem:[#allocation0] sm:$0x1] %vm57, %v56
    %s59 = scalar_lea.vmem %s0, 6
    %v60 = vld [vmem:[%s59] sm:$0x1]
    %61 = vrot.lane.b32.xlu0 %v60, 48
    %v62 = vpop.permute.xlu0 %61
    %vm63 = vcmask 458112
    %64 = vst.msk [vmem:[#allocation0] sm:$0x1] %vm63, %v62
    %s65 = scalar_lea.vmem %s0, 5
    %v66 = vld [vmem:[%s65] sm:$0x1]
    %67 = vrot.lane.b32.xlu0 %v66, 40
    %v68 = vpop.permute.xlu0 %67
    %vm69 = vcmask 392512
    %70 = vst.msk [vmem:[#allocation0] sm:$0x1] %vm69, %v68
    %s71 = scalar_lea.vmem %s0, 4
    %v72 = vld [vmem:[%s71] sm:$0x1]
    %73 = vrot.lane.b32.xlu0 %v72, 32
    %v74 = vpop.permute.xlu0 %73
    %vm75 = vcmask 326912
    %76 = vst.msk [vmem:[#allocation0] sm:$0x1] %vm75, %v74
    %s77 = scalar_lea.vmem %s0, 3
    %v78 = vld [vmem:[%s77] sm:$0x1]
    %79 = vrot.lane.b32.xlu0 %v78, 24
    %v80 = vpop.permute.xlu0 %79
    %vm81 = vcmask 261312
    %82 = vst.msk [vmem:[#allocation0] sm:$0x1] %vm81, %v80
    %s83 = scalar_lea.vmem %s0, 2
    %v84 = vld [vmem:[%s83] sm:$0x1]
    %85 = vrot.lane.b32.xlu0 %v84, 16
    %v86 = vpop.permute.xlu0 %85
    %vm87 = vcmask 195712
    %88 = vst.msk [vmem:[#allocation0] sm:$0x1] %vm87, %v86
    %s89 = scalar_lea.vmem %s0, 1
    %v90 = vld [vmem:[%s89] sm:$0x1]
    %91 = vrot.lane.b32.xlu0 %v90, 8
    %v92 = vpop.permute.xlu0 %91
    %vm93 = vcmask 130112
    %94 = vst.msk [vmem:[#allocation0] sm:$0x1] %vm93, %v92
    %s96 = sshllo.u32 0, 1
    %v98 = vld [vmem:[#allocation0] sm:%s96]
    %s99 = sshllo.u32 0, 1
    %100 = vst [vmem:[%s1] sm:%s99] %v98

// kernel: tile.23
$region0: #{tile.23}
  #allocation0 [shape = 's32[1]{0}', space=sflag, size = 0x4, scoped, tag = 'scoped memory for tile.23']
  %s0 = inlined_call_operand.vmem [shape: f32[8], index: 0, kind: input, shape index: {}]
  %s1 = inlined_call_operand.vmem [shape: f32[16,8], index: 1, kind: output, shape index: {}]
  // Predicated region
  $region2: #{tile.23} parent=0 // pred_check
    _
  $region3: #{tile.23} parent=0 // pred_check_branch
    %3 = sbr.rel (0) target = $region5
  $region4: #{tile.23} parent=0 // pred_region
    _
  $region5: #{tile.23} parent=0 // pred_fallthru
    _
  %v4 = vld [vmem:[%s0] ss:$0 sm:$0xff]
  %5 = vst [vmem:[%s1] sm:$0xff] %v4
  %s6 = scalar_lea.vmem %s1, 8
  %7 = vst [vmem:[%s6] sm:$0xff] %v4

// kernel: decoder_block_forward.1
$region0: #{decoder_block_forward.1}
  #allocation0 [shape = 'u32[]', space=smem, size = 0x4, offset = 0x4, fixed_abs, tag = 'smem constant byte address 0x4 - core index']
  #allocation1 [shape = 'u32[144,128]{1,0:T(1,128)}', space=vmem, size = 0x12000, scoped, tag = 'internal scratch']
  %s0 = inlined_call_operand.hbm [shape: bf16[32,96], index: 0, kind: input, shape index: {}]
  %s1 = inlined_call_operand.hbm [shape: bf16[32,32], index: 1, kind: input, shape index: {}]
  %s2 = inlined_call_operand.hbm [shape: bf16[32,32], index: 2, kind: input, shape index: {}]
  %s3 = inlined_call_operand.hbm [shape: bf16[3,96,128], index: 3, kind: input, shape index: {}]
  %s4 = inlined_call_operand.hbm [shape: bf16[3,128,128], index: 4, kind: input, shape index: {}]
  %s5 = inlined_call_operand.hbm [shape: f32[2,128], index: 5, kind: input, shape index: {}]
  %s6 = inlined_call_operand.hbm [shape: f32[2,128], index: 6, kind: input, shape index: {}]
  %s7 = inlined_call_operand.hbm [shape: f32[32,128], index: 7, kind: output, shape index: {}]
  %s8 = sld [smem:[#allocation0]]
  $region66: #{decoder_block_forward.1} parent=0
    _
  %s10 = ssub.s32 1, %s8
  %s11 = scalar_select 0, %s10, %s8
  $region1: #{decoder_block_forward.1} parent=0
    #allocation2 [shape = 'u8[8192]{0}', space=vmem, size = 0x2000, scoped, tag = 'input window, operand 0, single buffered']
    #allocation3 [shape = 's32[1]{0}', space=sflag, size = 0x4, scoped, tag = 'scoped memory for decoder_block_forward.1']
    #allocation4 [shape = 's32[1]{0}', space=sflag, size = 0x4, scoped, tag = 'scoped memory for decoder_block_forward.1']
    #allocation5 [shape = 'u8[8192]{0}', space=vmem, size = 0x2000, scoped, tag = 'input window, operand 1, single buffered']
    #allocation6 [shape = 's32[1]{0}', space=sflag, size = 0x4, scoped, tag = 'scoped memory for decoder_block_forward.1']
    #allocation7 [shape = 'u8[8192]{0}', space=vmem, size = 0x2000, scoped, tag = 'input window, operand 2, single buffered']
    #allocation8 [shape = 'u8[73728]{0}', space=vmem, size = 0x12000, scoped, tag = 'input window, operand 3, single buffered']
    #allocation9 [shape = 's32[1]{0}', space=sflag, size = 0x4, scoped, tag = 'scoped memory for decoder_block_forward.1']
    #allocation10 [shape = 'u8[98304]{0}', space=vmem, size = 0x18000, scoped, tag = 'input window, operand 4, single buffered']
    #allocation11 [shape = 'u8[1024]{0}', space=vmem, size = 0x400, scoped, tag = 'input window, operand 5, single buffered']
    #allocation12 [shape = 's32[1]{0}', space=sflag, size = 0x4, scoped, tag = 'scoped memory for decoder_block_forward.1']
    #allocation13 [shape = 'u8[1024]{0}', space=vmem, size = 0x400, scoped, tag = 'input window, operand 6, single buffered']
    #allocation14 [shape = 'u8[16384]{0}', space=vmem, size = 0x4000, scoped, tag = 'output window, operand 0, single buffered']
    %12 = vsyncpa [#allocation3], 0
    %13 = vsyncpa [#allocation6], 0
    %14 = vsyncpa [#allocation9], 0
    %15 = vsyncpa [#allocation12], 0
    %16 = vsyncpa [#allocation4], 0
    // Predicated region
    $region2: #{decoder_block_forward.1} parent=1 // pred_check
      _
    $region3: #{decoder_block_forward.1} parent=1 // pred_check_branch
      %18 = sbr.rel (0) target = $region5
    $region4: #{decoder_block_forward.1} parent=1 // pred_region
      %s20 = ssub.s32 256, 256
      %21 = vsyncadd [#allocation3], %s20
      %s22 = sshll.u32 [#allocation2], 4
      %s23 = int_to_ptr.vmem [resolvable:$true] %s22
      %28 = dma.hbm_to_vmem [thread:$0]  %s0, 256, %s23, [#allocation3], 64, 64, 4
    $region5: #{decoder_block_forward.1} parent=1 // pred_fallthru
      _
    // Predicated region
    $region6: #{decoder_block_forward.1} parent=1 // pred_check
      _
    $region7: #{decoder_block_forward.1} parent=1 // pred_check_branch
      %30 = sbr.rel (0) target = $region9
    $region8: #{decoder_block_forward.1} parent=1 // pred_region
      %s32 = ssub.s32 256, 256
      %33 = vsyncadd [#allocation6], %s32
      %s34 = sshll.u32 [#allocation5], 4
      %s35 = int_to_ptr.vmem [resolvable:$true] %s34
      %40 = dma.hbm_to_vmem [thread:$0]  %s1, 256, %s35, [#allocation6], 64, 64, 4
    $region9: #{decoder_block_forward.1} parent=1 // pred_fallthru
      _
    // Predicated region
    $region10: #{decoder_block_forward.1} parent=1 // pred_check
      _
    $region11: #{decoder_block_forward.1} parent=1 // pred_check_branch
      %42 = sbr.rel (0) target = $region13
    $region12: #{decoder_block_forward.1} parent=1 // pred_region
      %s44 = ssub.s32 256, 256
      %45 = vsyncadd [#allocation6], %s44
      %s46 = sshll.u32 [#allocation7], 4
      %s47 = int_to_ptr.vmem [resolvable:$true] %s46
      %52 = dma.hbm_to_vmem [thread:$0]  %s2, 256, %s47, [#allocation6], 64, 64, 4
    $region13: #{decoder_block_forward.1} parent=1 // pred_fallthru
      _
    // Predicated region
    $region14: #{decoder_block_forward.1} parent=1 // pred_check
      _
    $region15: #{decoder_block_forward.1} parent=1 // pred_check_branch
      %54 = sbr.rel (0) target = $region17
    $region16: #{decoder_block_forward.1} parent=1 // pred_region
      %s56 = ssub.s32 2304, 2304
      %57 = vsyncadd [#allocation9], %s56
      %s58 = sshll.u32 [#allocation8], 4
      %s59 = int_to_ptr.vmem [resolvable:$true] %s58
      %64 = dma.hbm_to_vmem [thread:$0]  %s3, 2304, %s59, [#allocation9], 64, 64, 4
    $region17: #{decoder_block_forward.1} parent=1 // pred_fallthru
      _
    // Predicated region
    $region18: #{decoder_block_forward.1} parent=1 // pred_check
      _
    $region19: #{decoder_block_forward.1} parent=1 // pred_check_branch
      %66 = sbr.rel (0) target = $region21
    $region20: #{decoder_block_forward.1} parent=1 // pred_region
      %s68 = ssub.s32 3072, 3072
      %69 = vsyncadd [#allocation9], %s68
      %s70 = sshll.u32 [#allocation10], 4
      %s71 = int_to_ptr.vmem [resolvable:$true] %s70
      %76 = dma.hbm_to_vmem [thread:$0]  %s4, 3072, %s71, [#allocation9], 64, 64, 4
    $region21: #{decoder_block_forward.1} parent=1 // pred_fallthru
      _
    // Predicated region
    $region22: #{decoder_block_forward.1} parent=1 // pred_check
      _
    $region23: #{decoder_block_forward.1} parent=1 // pred_check_branch
      %78 = sbr.rel (0) target = $region25
    $region24: #{decoder_block_forward.1} parent=1 // pred_region
      %s80 = ssub.s32 32, 32
      %81 = vsyncadd [#allocation12], %s80
      %s83 = sshll.u32 [#allocation11], 4
      %s84 = int_to_ptr.vmem [resolvable:$true] %s83
      %86 = dma.hbm_to_vmem [thread:$0]  %s5, 32, %s84, [#allocation12]
    $region25: #{decoder_block_forward.1} parent=1 // pred_fallthru
      _
    // Predicated region
    $region26: #{decoder_block_forward.1} parent=1 // pred_check
      _
    $region27: #{decoder_block_forward.1} parent=1 // pred_check_branch
      %88 = sbr.rel (0) target = $region29
    $region28: #{decoder_block_forward.1} parent=1 // pred_region
      %s90 = ssub.s32 32, 32
      %91 = vsyncadd [#allocation12], %s90
      %s93 = sshll.u32 [#allocation13], 4
      %s94 = int_to_ptr.vmem [resolvable:$true] %s93
      %96 = dma.hbm_to_vmem [thread:$0]  %s6, 32, %s94, [#allocation12]
    $region29: #{decoder_block_forward.1} parent=1 // pred_fallthru
      _
    // Predicated region
    $region30: #{decoder_block_forward.1} parent=1 // pred_check
      _
    $region31: #{decoder_block_forward.1} parent=1 // pred_check_branch
      %98 = sbr.rel (0) target = $region33
    $region32: #{decoder_block_forward.1} parent=1 // pred_region
      %99 = dma.done [#allocation3], 256
    $region33: #{decoder_block_forward.1} parent=1 // pred_fallthru
      _
    // Predicated region
    $region34: #{decoder_block_forward.1} parent=1 // pred_check
      _
    $region35: #{decoder_block_forward.1} parent=1 // pred_check_branch
      %101 = sbr.rel (0) target = $region37
    $region36: #{decoder_block_forward.1} parent=1 // pred_region
      %102 = dma.done [#allocation6], 256
    $region37: #{decoder_block_forward.1} parent=1 // pred_fallthru
      _
    // Predicated region
    $region38: #{decoder_block_forward.1} parent=1 // pred_check
      _
    $region39: #{decoder_block_forward.1} parent=1 // pred_check_branch
      %104 = sbr.rel (0) target = $region41
    $region40: #{decoder_block_forward.1} parent=1 // pred_region
      %105 = dma.done [#allocation6], 256
    $region41: #{decoder_block_forward.1} parent=1 // pred_fallthru
      _
    // Predicated region
    $region42: #{decoder_block_forward.1} parent=1 // pred_check
      _
    $region43: #{decoder_block_forward.1} parent=1 // pred_check_branch
      %107 = sbr.rel (0) target = $region45
    $region44: #{decoder_block_forward.1} parent=1 // pred_region
      %108 = dma.done [#allocation9], 2304
    $region45: #{decoder_block_forward.1} parent=1 // pred_fallthru
      _
    // Predicated region
    $region46: #{decoder_block_forward.1} parent=1 // pred_check
      _
    $region47: #{decoder_block_forward.1} parent=1 // pred_check_branch
      %110 = sbr.rel (0) target = $region49
    $region48: #{decoder_block_forward.1} parent=1 // pred_region
      %111 = dma.done [#allocation9], 3072
    $region49: #{decoder_block_forward.1} parent=1 // pred_fallthru
      _
    // Predicated region
    $region50: #{decoder_block_forward.1} parent=1 // pred_check
      _
    $region51: #{decoder_block_forward.1} parent=1 // pred_check_branch
      %113 = sbr.rel (0) target = $region53
    $region52: #{decoder_block_forward.1} parent=1 // pred_region
      %114 = dma.done [#allocation12], 32
    $region53: #{decoder_block_forward.1} parent=1 // pred_fallthru
      _
    // Predicated region
    $region54: #{decoder_block_forward.1} parent=1 // pred_check
      _
    $region55: #{decoder_block_forward.1} parent=1 // pred_check_branch
      %116 = sbr.rel (0) target = $region57
    $region56: #{decoder_block_forward.1} parent=1 // pred_region
      %117 = dma.done [#allocation12], 32
    $region57: #{decoder_block_forward.1} parent=1 // pred_fallthru
      _
    %v119 = vld [vmem:[#allocation5] sm:$0xf]
    %v120 = vld [vmem:[#allocation5 + $0x4] sm:$0xf]
    %v121 = vld [vmem:[#allocation5 + $0x8] sm:$0xf]
    %v122 = vld [vmem:[#allocation5 + $0xc] sm:$0xf]
    %v123 = vld [vmem:[#allocation7] sm:$0xf]
    %v124 = vld [vmem:[#allocation7 + $0x4] sm:$0xf]
    %v125 = vld [vmem:[#allocation7 + $0x8] sm:$0xf]
    %v126 = vld [vmem:[#allocation7 + $0xc] sm:$0xf]
    %v127 = vld [vmem:[#allocation2] sm:$0xf]
    %v128 = vld [vmem:[#allocation2 + $0x4] sm:$0xf]
    %v129 = vld [vmem:[#allocation2 + $0x8] sm:$0xf]
    %v130 = vld [vmem:[#allocation2 + $0xc] sm:$0xf]
    %v131 = vld [vmem:[#allocation11] sm:$0x3]
    %s132 = scalar_lea.vmem [#allocation8], 48
    %v133 = vld [vmem:[%s132] sm:$0xf]
    %v134 = vld [vmem:[%s132 + $0x4] sm:$0xf]
    %v135 = vld [vmem:[%s132 + $0x8] sm:$0xf]
    %v136 = vld [vmem:[%s132 + $0xc] sm:$0xf]
    %v137 = vld [vmem:[%s132 + $0x10] sm:$0xf]
    %v138 = vld [vmem:[%s132 + $0x14] sm:$0xf]
    %v139 = vld [vmem:[%s132 + $0x18] sm:$0xf]
    %v140 = vld [vmem:[%s132 + $0x1c] sm:$0xf]
    %v141 = vld [vmem:[%s132 + $0x20] sm:$0xf]
    %v142 = vld [vmem:[%s132 + $0x24] sm:$0xf]
    %v143 = vld [vmem:[%s132 + $0x28] sm:$0xf]
    %v144 = vld [vmem:[%s132 + $0x2c] sm:$0xf]
    %v149 = vunpack.c.l.b16 %v119
    %v150 = vunpack.c.l.b16 %v120
    %v151 = vunpack.c.l.b16 %v121
    %v152 = vunpack.c.l.b16 %v122
    %v153 = vpack.c.b16 %v150, %v149
    %v154 = vpack.c.b16 %v152, %v151
    %v159 = vunpack.c.l.b16 %v127
    %v160 = vunpack.c.l.b16 %v128
    %v161 = vunpack.c.l.b16 %v129
    %v162 = vunpack.c.l.b16 %v130
    %v163 = vpack.c.b16 %v160, %v159
    %v164 = vpack.c.b16 %v162, %v161
    %vm167 = vcmask 261120
    %v169 = vsel %vm167, %v153, 0
    %v172 = vsel %vm167, %v154, 0
    %174 = vmatprep.subr.bf16.mxu0 0
    %175 = vmatpush1.bf16.msra.mxu0 %v163
    %176 = vmatprep.subr.bf16.mxu0 0
    %177 = vmatpush1.bf16.msra.mxu0 %v164
    %178 = vmatprep.subr.bf16.mxu0 0
    %179 = vmatpush1.bf16.msra.mxu0 0
    %180 = vmatprep.subr.bf16.mxu0 0
    %181 = vmatpush1.bf16.msra.mxu0 0
    %182 = vmatprep.subr.bf16.mxu0 0
    %183 = vmatpush1.bf16.msra.mxu0 0
    %184 = vmatprep.subr.bf16.mxu0 0
    %185 = vmatpush1.bf16.msra.mxu0 0
    %186 = vmatprep.subr.bf16.mxu0 0
    %187 = vmatpush1.bf16.msra.mxu0 0
    %188 = vmatprep.subr.bf16.mxu0 0
    %189 = vmatpush1.bf16.msra.mxu0 0
    %190 = vmatprep.subr.bf16.mxu0 0
    %191 = vmatpush1.bf16.msra.mxu0 0
    %192 = vmatprep.subr.bf16.mxu0 0
    %193 = vmatpush1.bf16.msra.mxu0 0
    %194 = vmatprep.subr.bf16.mxu0 0
    %195 = vmatpush1.bf16.msra.mxu0 0
    %196 = vmatprep.subr.bf16.mxu0 0
    %197 = vmatpush1.bf16.msra.mxu0 0
    %198 = vmatprep.subr.bf16.mxu0 0
    %199 = vmatpush1.bf16.msra.mxu0 0
    %200 = vmatprep.subr.bf16.mxu0 0
    %201 = vmatpush1.bf16.msra.mxu0 0
    %202 = vmatprep.subr.bf16.mxu0 0
    %203 = vmatpush1.bf16.msra.mxu0 0
    %204 = vmatprep.subr.bf16.mxu0 0
    %205 = vmatpush1.bf16.msra.mxu0 0
    %206 = vmatprep.mubr.bf16.mxu0 0
    %207 = vmatmul.mubr.bf16.gmra.mrb[0].mxu0 %v169
    %v208 = vpop.f32.mrb[0].mxu0
    %v209 = vadd.f32 0.0, %v208
    %v210 = vpop.f32.mrb[0].mxu0
    %v211 = vpop.f32.mrb[0].mxu0
    %v212 = vadd.f32 0.0, %v211
    %v213 = vpop.f32.mrb[0].mxu0
    %214 = vmatprep.mubr.bf16.mxu0 0
    %215 = vmatmul.mubr.bf16.gmra.mrb[0].mxu0 %v172
    %v216 = vpop.f32.mrb[0].mxu0
    %v217 = vadd.f32 0.0, %v216
    %v218 = vpop.f32.mrb[0].mxu0
    %v219 = vpop.f32.mrb[0].mxu0
    %v220 = vadd.f32 0.0, %v219
    %v221 = vpop.f32.mrb[0].mxu0
    %222 = vdwg.mxu0
    %v223 = vpack.c.bf16 %v212, %v209
    %v224 = vpack.c.bf16 %v220, %v217
    %v225 = vld [vmem:[#allocation8] sm:$0xf]
    %v226 = vld [vmem:[#allocation8 + $0x4] sm:$0xf]
    %v227 = vld [vmem:[#allocation8 + $0x8] sm:$0xf]
    %v228 = vld [vmem:[#allocation8 + $0xc] sm:$0xf]
    %v229 = vld [vmem:[#allocation8 + $0x10] sm:$0xf]
    %v230 = vld [vmem:[#allocation8 + $0x14] sm:$0xf]
    %v231 = vld [vmem:[#allocation8 + $0x18] sm:$0xf]
    %v232 = vld [vmem:[#allocation8 + $0x1c] sm:$0xf]
    %v233 = vld [vmem:[#allocation8 + $0x20] sm:$0xf]
    %v234 = vld [vmem:[#allocation8 + $0x24] sm:$0xf]
    %v235 = vld [vmem:[#allocation8 + $0x28] sm:$0xf]
    %v236 = vld [vmem:[#allocation8 + $0x2c] sm:$0xf]
    %v249 = vunpack.c.l.b16 %v225
    %v250 = vunpack.c.l.b16 %v226
    %v251 = vunpack.c.l.b16 %v227
    %v252 = vunpack.c.l.b16 %v228
    %v253 = vunpack.c.l.b16 %v229
    %v254 = vunpack.c.l.b16 %v230
    %v255 = vunpack.c.l.b16 %v231
    %v256 = vunpack.c.l.b16 %v232
    %v257 = vunpack.c.l.b16 %v233
    %v258 = vunpack.c.l.b16 %v234
    %v259 = vunpack.c.l.b16 %v235
    %v260 = vunpack.c.l.b16 %v236
    %v261 = vpack.c.b16 %v250, %v249
    %v262 = vpack.c.b16 %v252, %v251
    %v263 = vpack.c.b16 %v254, %v253
    %v264 = vpack.c.b16 %v256, %v255
    %v265 = vpack.c.b16 %v258, %v257
    %v266 = vpack.c.b16 %v260, %v259
    %vm273 = vcmask 785408
    %v275 = vsel %vm273, %v223, 0
    %v278 = vsel %vm273, %v224, 0
    %280 = vmatprep.subr.bf16.mxu0 0
    %281 = vmatpush1.bf16.msra.mxu0 %v261
    %282 = vmatprep.subr.bf16.mxu0 0
    %283 = vmatpush1.bf16.msra.mxu0 %v262
    %284 = vmatprep.subr.bf16.mxu0 0
    %285 = vmatpush1.bf16.msra.mxu0 %v263
    %286 = vmatprep.subr.bf16.mxu0 0
    %287 = vmatpush1.bf16.msra.mxu0 %v264
    %288 = vmatprep.subr.bf16.mxu0 0
    %289 = vmatpush1.bf16.msra.mxu0 %v265
    %290 = vmatprep.subr.bf16.mxu0 0
    %291 = vmatpush1.bf16.msra.mxu0 %v266
    %292 = vmatprep.subr.bf16.mxu0 0
    %293 = vmatpush1.bf16.msra.mxu0 0
    %294 = vmatprep.subr.bf16.mxu0 0
    %295 = vmatpush1.bf16.msra.mxu0 0
    %296 = vmatprep.subr.bf16.mxu0 0
    %297 = vmatpush1.bf16.msra.mxu0 0
    %298 = vmatprep.subr.bf16.mxu0 0
    %299 = vmatpush1.bf16.msra.mxu0 0
    %300 = vmatprep.subr.bf16.mxu0 0
    %301 = vmatpush1.bf16.msra.mxu0 0
    %302 = vmatprep.subr.bf16.mxu0 0
    %303 = vmatpush1.bf16.msra.mxu0 0
    %304 = vmatprep.subr.bf16.mxu0 0
    %305 = vmatpush1.bf16.msra.mxu0 0
    %306 = vmatprep.subr.bf16.mxu0 0
    %307 = vmatpush1.bf16.msra.mxu0 0
    %308 = vmatprep.subr.bf16.mxu0 0
    %309 = vmatpush1.bf16.msra.mxu0 0
    %310 = vmatprep.subr.bf16.mxu0 0
    %311 = vmatpush1.bf16.msra.mxu0 0
    %312 = vmatprep.mubr.bf16.mxu0 0
    %313 = vmatmul.mubr.bf16.gmra.mrb[0].mxu0 %v275
    %v314 = vpop.f32.mrb[0].mxu0
    %v315 = vadd.f32 0.0, %v314
    %v316 = vpop.f32.mrb[0].mxu0
    %v317 = vpop.f32.mrb[0].mxu0
    %v318 = vadd.f32 0.0, %v317
    %v319 = vpop.f32.mrb[0].mxu0
    %320 = vmatprep.mubr.bf16.mxu0 0
    %321 = vmatmul.mubr.bf16.gmra.mrb[0].mxu0 %v278
    %v322 = vpop.f32.mrb[0].mxu0
    %v323 = vadd.f32 0.0, %v322
    %v324 = vpop.f32.mrb[0].mxu0
    %v325 = vpop.f32.mrb[0].mxu0
    %v326 = vadd.f32 0.0, %v325
    %v327 = vpop.f32.mrb[0].mxu0
    %328 = vdwg.mxu0
    %v341 = vunpack.c.l.b16 %v133
    %v342 = vunpack.c.l.b16 %v134
    %v343 = vunpack.c.l.b16 %v135
    %v344 = vunpack.c.l.b16 %v136
    %v345 = vunpack.c.l.b16 %v137
    %v346 = vunpack.c.l.b16 %v138
    %v347 = vunpack.c.l.b16 %v139
    %v348 = vunpack.c.l.b16 %v140
    %v349 = vunpack.c.l.b16 %v141
    %v350 = vunpack.c.l.b16 %v142
    %v351 = vunpack.c.l.b16 %v143
    %v352 = vunpack.c.l.b16 %v144
    %v353 = vpack.c.b16 %v342, %v341
    %v354 = vpack.c.b16 %v344, %v343
    %v355 = vpack.c.b16 %v346, %v345
    %v356 = vpack.c.b16 %v348, %v347
    %v357 = vpack.c.b16 %v350, %v349
    %v358 = vpack.c.b16 %v352, %v351
    %v366 = vsel %vm273, %v163, 0
    %v369 = vsel %vm273, %v164, 0
    %371 = vmatprep.subr.bf16.mxu0 0
    %372 = vmatpush1.bf16.msra.mxu0 %v353
    %373 = vmatprep.subr.bf16.mxu0 0
    %374 = vmatpush1.bf16.msra.mxu0 %v354
    %375 = vmatprep.subr.bf16.mxu0 0
    %376 = vmatpush1.bf16.msra.mxu0 %v355
    %377 = vmatprep.subr.bf16.mxu0 0
    %378 = vmatpush1.bf16.msra.mxu0 %v356
    %379 = vmatprep.subr.bf16.mxu0 0
    %380 = vmatpush1.bf16.msra.mxu0 %v357
    %381 = vmatprep.subr.bf16.mxu0 0
    %382 = vmatpush1.bf16.msra.mxu0 %v358
    %383 = vmatprep.subr.bf16.mxu0 0
    %384 = vmatpush1.bf16.msra.mxu0 0
    %385 = vmatprep.subr.bf16.mxu0 0
    %386 = vmatpush1.bf16.msra.mxu0 0
    %387 = vmatprep.subr.bf16.mxu0 0
    %388 = vmatpush1.bf16.msra.mxu0 0
    %389 = vmatprep.subr.bf16.mxu0 0
    %390 = vmatpush1.bf16.msra.mxu0 0
    %391 = vmatprep.subr.bf16.mxu0 0
    %392 = vmatpush1.bf16.msra.mxu0 0
    %393 = vmatprep.subr.bf16.mxu0 0
    %394 = vmatpush1.bf16.msra.mxu0 0
    %395 = vmatprep.subr.bf16.mxu0 0
    %396 = vmatpush1.bf16.msra.mxu0 0
    %397 = vmatprep.subr.bf16.mxu0 0
    %398 = vmatpush1.bf16.msra.mxu0 0
    %399 = vmatprep.subr.bf16.mxu0 0
    %400 = vmatpush1.bf16.msra.mxu0 0
    %401 = vmatprep.subr.bf16.mxu0 0
    %402 = vmatpush1.bf16.msra.mxu0 0
    %403 = vmatprep.mubr.bf16.mxu0 0
    %404 = vmatmul.mubr.bf16.gmra.mrb[0].mxu0 %v366
    %v405 = vpop.f32.mrb[0].mxu0
    %v406 = vadd.f32 %v315, %v405
    %v407 = vpop.f32.mrb[0].mxu0
    %v408 = vpop.f32.mrb[0].mxu0
    %v409 = vadd.f32 %v318, %v408
    %v410 = vpop.f32.mrb[0].mxu0
    %411 = vmatprep.mubr.bf16.mxu0 0
    %412 = vmatmul.mubr.bf16.gmra.mrb[0].mxu0 %v369
    %v413 = vpop.f32.mrb[0].mxu0
    %v414 = vadd.f32 %v323, %v413
    %v415 = vpop.f32.mrb[0].mxu0
    %v416 = vpop.f32.mrb[0].mxu0
    %v417 = vadd.f32 %v326, %v416
    %v418 = vpop.f32.mrb[0].mxu0
    %419 = vdwg.mxu0
    %v424 = vunpack.c.l.b16 %v123
    %v425 = vunpack.c.l.b16 %v124
    %v426 = vunpack.c.l.b16 %v125
    %v427 = vunpack.c.l.b16 %v126
    %v428 = vpack.c.b16 %v425, %v424
    %v429 = vpack.c.b16 %v427, %v426
    %v431 = vsel %vm167, %v428, 0
    %v434 = vsel %vm167, %v429, 0
    %436 = vmatprep.subr.bf16.mxu0 0
    %437 = vmatpush1.bf16.msra.mxu0 %v163
    %438 = vmatprep.subr.bf16.mxu0 0
    %439 = vmatpush1.bf16.msra.mxu0 %v164
    %440 = vmatprep.subr.bf16.mxu0 0
    %441 = vmatpush1.bf16.msra.mxu0 0
    %442 = vmatprep.subr.bf16.mxu0 0
    %443 = vmatpush1.bf16.msra.mxu0 0
    %444 = vmatprep.subr.bf16.mxu0 0
    %445 = vmatpush1.bf16.msra.mxu0 0
    %446 = vmatprep.subr.bf16.mxu0 0
    %447 = vmatpush1.bf16.msra.mxu0 0
    %448 = vmatprep.subr.bf16.mxu0 0
    %449 = vmatpush1.bf16.msra.mxu0 0
    %450 = vmatprep.subr.bf16.mxu0 0
    %451 = vmatpush1.bf16.msra.mxu0 0
    %452 = vmatprep.subr.bf16.mxu0 0
    %453 = vmatpush1.bf16.msra.mxu0 0
    %454 = vmatprep.subr.bf16.mxu0 0
    %455 = vmatpush1.bf16.msra.mxu0 0
    %456 = vmatprep.subr.bf16.mxu0 0
    %457 = vmatpush1.bf16.msra.mxu0 0
    %458 = vmatprep.subr.bf16.mxu0 0
    %459 = vmatpush1.bf16.msra.mxu0 0
    %460 = vmatprep.subr.bf16.mxu0 0
    %461 = vmatpush1.bf16.msra.mxu0 0
    %462 = vmatprep.subr.bf16.mxu0 0
    %463 = vmatpush1.bf16.msra.mxu0 0
    %464 = vmatprep.subr.bf16.mxu0 0
    %465 = vmatpush1.bf16.msra.mxu0 0
    %466 = vmatprep.subr.bf16.mxu0 0
    %467 = vmatpush1.bf16.msra.mxu0 0
    %468 = vmatprep.mubr.bf16.mxu0 0
    %469 = vmatmul.mubr.bf16.gmra.mrb[0].mxu0 %v431
    %v470 = vpop.f32.mrb[0].mxu0
    %v471 = vadd.f32 0.0, %v470
    %v472 = vpop.f32.mrb[0].mxu0
    %v473 = vpop.f32.mrb[0].mxu0
    %v474 = vadd.f32 0.0, %v473
    %v475 = vpop.f32.mrb[0].mxu0
    %476 = vmatprep.mubr.bf16.mxu0 0
    %477 = vmatmul.mubr.bf16.gmra.mrb[0].mxu0 %v434
    %v478 = vpop.f32.mrb[0].mxu0
    %v479 = vadd.f32 0.0, %v478
    %v480 = vpop.f32.mrb[0].mxu0
    %v481 = vpop.f32.mrb[0].mxu0
    %v482 = vadd.f32 0.0, %v481
    %v483 = vpop.f32.mrb[0].mxu0
    %484 = vdwg.mxu0
    %v485 = vpack.c.bf16 %v474, %v471
    %v486 = vpack.c.bf16 %v482, %v479
    %s487 = scalar_lea.vmem [#allocation8], 96
    %v488 = vld [vmem:[%s487] sm:$0xf]
    %v489 = vld [vmem:[%s487 + $0x4] sm:$0xf]
    %v490 = vld [vmem:[%s487 + $0x8] sm:$0xf]
    %v491 = vld [vmem:[%s487 + $0xc] sm:$0xf]
    %v492 = vld [vmem:[%s487 + $0x10] sm:$0xf]
    %v493 = vld [vmem:[%s487 + $0x14] sm:$0xf]
    %v494 = vld [vmem:[%s487 + $0x18] sm:$0xf]
    %v495 = vld [vmem:[%s487 + $0x1c] sm:$0xf]
    %v496 = vld [vmem:[%s487 + $0x20] sm:$0xf]
    %v497 = vld [vmem:[%s487 + $0x24] sm:$0xf]
    %v498 = vld [vmem:[%s487 + $0x28] sm:$0xf]
    %v499 = vld [vmem:[%s487 + $0x2c] sm:$0xf]
    %v512 = vunpack.c.l.b16 %v488
    %v513 = vunpack.c.l.b16 %v489
    %v514 = vunpack.c.l.b16 %v490
    %v515 = vunpack.c.l.b16 %v491
    %v516 = vunpack.c.l.b16 %v492
    %v517 = vunpack.c.l.b16 %v493
    %v518 = vunpack.c.l.b16 %v494
    %v519 = vunpack.c.l.b16 %v495
    %v520 = vunpack.c.l.b16 %v496
    %v521 = vunpack.c.l.b16 %v497
    %v522 = vunpack.c.l.b16 %v498
    %v523 = vunpack.c.l.b16 %v499
    %v524 = vpack.c.b16 %v513, %v512
    %v525 = vpack.c.b16 %v515, %v514
    %v526 = vpack.c.b16 %v517, %v516
    %v527 = vpack.c.b16 %v519, %v518
    %v528 = vpack.c.b16 %v521, %v520
    %v529 = vpack.c.b16 %v523, %v522
    %v537 = vsel %vm273, %v485, 0
    %v540 = vsel %vm273, %v486, 0
    %542 = vmatprep.subr.bf16.mxu0 0
    %543 = vmatpush1.bf16.msra.mxu0 %v524
    %544 = vmatprep.subr.bf16.mxu0 0
    %545 = vmatpush1.bf16.msra.mxu0 %v525
    %546 = vmatprep.subr.bf16.mxu0 0
    %547 = vmatpush1.bf16.msra.mxu0 %v526
    %548 = vmatprep.subr.bf16.mxu0 0
    %549 = vmatpush1.bf16.msra.mxu0 %v527
    %550 = vmatprep.subr.bf16.mxu0 0
    %551 = vmatpush1.bf16.msra.mxu0 %v528
    %552 = vmatprep.subr.bf16.mxu0 0
    %553 = vmatpush1.bf16.msra.mxu0 %v529
    %554 = vmatprep.subr.bf16.mxu0 0
    %555 = vmatpush1.bf16.msra.mxu0 0
    %556 = vmatprep.subr.bf16.mxu0 0
    %557 = vmatpush1.bf16.msra.mxu0 0
    %558 = vmatprep.subr.bf16.mxu0 0
    %559 = vmatpush1.bf16.msra.mxu0 0
    %560 = vmatprep.subr.bf16.mxu0 0
    %561 = vmatpush1.bf16.msra.mxu0 0
    %562 = vmatprep.subr.bf16.mxu0 0
    %563 = vmatpush1.bf16.msra.mxu0 0
    %564 = vmatprep.subr.bf16.mxu0 0
    %565 = vmatpush1.bf16.msra.mxu0 0
    %566 = vmatprep.subr.bf16.mxu0 0
    %567 = vmatpush1.bf16.msra.mxu0 0
    %568 = vmatprep.subr.bf16.mxu0 0
    %569 = vmatpush1.bf16.msra.mxu0 0
    %570 = vmatprep.subr.bf16.mxu0 0
    %571 = vmatpush1.bf16.msra.mxu0 0
    %572 = vmatprep.subr.bf16.mxu0 0
    %573 = vmatpush1.bf16.msra.mxu0 0
    %574 = vmatprep.mubr.bf16.mxu0 0
    %575 = vmatmul.mubr.bf16.gmra.mrb[0].mxu0 %v537
    %v576 = vpop.f32.mrb[0].mxu0
    %v577 = vadd.f32 0.0, %v576
    %v578 = vpop.f32.mrb[0].mxu0
    %v579 = vpop.f32.mrb[0].mxu0
    %v580 = vadd.f32 0.0, %v579
    %v581 = vpop.f32.mrb[0].mxu0
    %582 = vmatprep.mubr.bf16.mxu0 0
    %583 = vmatmul.mubr.bf16.gmra.mrb[0].mxu0 %v540
    %v584 = vpop.f32.mrb[0].mxu0
    %v585 = vadd.f32 0.0, %v584
    %v586 = vpop.f32.mrb[0].mxu0
    %v587 = vpop.f32.mrb[0].mxu0
    %v588 = vadd.f32 0.0, %v587
    %v589 = vpop.f32.mrb[0].mxu0
    %590 = vdwg.mxu0
    %v591 = vadd.f32 %v406, %v577
    %v592 = vadd.f32 %v409, %v580
    %v593 = vadd.f32 %v414, %v585
    %v594 = vadd.f32 %v417, %v588
    %v595 = vlaneseq
    %v596 = vshrl.u32 %v595, 7
    %v597 = vsub.s32 0, %v596
    %v598 = vrot.slane %v131, %v597
    %v599 = vmul.f32 %v591, %v598
    %v600 = vmul.f32 %v592, %v598
    %v601 = vmul.f32 %v593, %v598
    %v602 = vmul.f32 %v594, %v598
    %v603 = vlaneseq
    %v604 = vshrl.u32 %v603, 7
    %v605 = vsub.s32 1, %v604
    %v606 = vrot.slane %v131, %v605
    %v607 = vadd.f32 %v599, %v606
    %v608 = vadd.f32 %v600, %v606
    %v609 = vadd.f32 %v601, %v606
    %v610 = vadd.f32 %v602, %v606
    %v611 = vmax.f32 %v607, 0.0
    %v612 = vmax.f32 %v608, 0.0
    %v613 = vmax.f32 %v609, 0.0
    %v614 = vmax.f32 %v610, 0.0
    %v615 = vpack.c.bf16 %v612, %v611
    %v616 = vpack.c.bf16 %v614, %v613
    %v617 = vld [vmem:[#allocation13] sm:$0x3]
    %s618 = scalar_lea.vmem [#allocation10], 64
    %v619 = vld [vmem:[%s618] sm:$0xf]
    %v620 = vld [vmem:[%s618 + $0x4] sm:$0xf]
    %v621 = vld [vmem:[%s618 + $0x8] sm:$0xf]
    %v622 = vld [vmem:[%s618 + $0xc] sm:$0xf]
    %v623 = vld [vmem:[%s618 + $0x10] sm:$0xf]
    %v624 = vld [vmem:[%s618 + $0x14] sm:$0xf]
    %v625 = vld [vmem:[%s618 + $0x18] sm:$0xf]
    %v626 = vld [vmem:[%s618 + $0x1c] sm:$0xf]
    %v627 = vld [vmem:[%s618 + $0x20] sm:$0xf]
    %v628 = vld [vmem:[%s618 + $0x24] sm:$0xf]
    %v629 = vld [vmem:[%s618 + $0x28] sm:$0xf]
    %v630 = vld [vmem:[%s618 + $0x2c] sm:$0xf]
    %v631 = vld [vmem:[%s618 + $0x30] sm:$0xf]
    %v632 = vld [vmem:[%s618 + $0x34] sm:$0xf]
    %v633 = vld [vmem:[%s618 + $0x38] sm:$0xf]
    %v634 = vld [vmem:[%s618 + $0x3c] sm:$0xf]
    %635 = vmatprep.subr.bf16.mxu0 0
    %636 = vmatpush1.bf16.msra.mxu0 %v615
    %637 = vmatprep.subr.bf16.mxu0 0
    %638 = vmatpush1.bf16.msra.mxu0 %v616
    %639 = vmatprep.subr.bf16.mxu0 0
    %640 = vmatpush1.bf16.msra.mxu0 0
    %641 = vmatprep.subr.bf16.mxu0 0
    %642 = vmatpush1.bf16.msra.mxu0 0
    %643 = vmatprep.subr.bf16.mxu0 0
    %644 = vmatpush1.bf16.msra.mxu0 0
    %645 = vmatprep.subr.bf16.mxu0 0
    %646 = vmatpush1.bf16.msra.mxu0 0
    %647 = vmatprep.subr.bf16.mxu0 0
    %648 = vmatpush1.bf16.msra.mxu0 0
    %649 = vmatprep.subr.bf16.mxu0 0
    %650 = vmatpush1.bf16.msra.mxu0 0
    %651 = vmatprep.subr.bf16.mxu0 0
    %652 = vmatpush1.bf16.msra.mxu0 0
    %653 = vmatprep.subr.bf16.mxu0 0
    %654 = vmatpush1.bf16.msra.mxu0 0
    %655 = vmatprep.subr.bf16.mxu0 0
    %656 = vmatpush1.bf16.msra.mxu0 0
    %657 = vmatprep.subr.bf16.mxu0 0
    %658 = vmatpush1.bf16.msra.mxu0 0
    %659 = vmatprep.subr.bf16.mxu0 0
    %660 = vmatpush1.bf16.msra.mxu0 0
    %661 = vmatprep.subr.bf16.mxu0 0
    %662 = vmatpush1.bf16.msra.mxu0 0
    %663 = vmatprep.subr.bf16.mxu0 0
    %664 = vmatpush1.bf16.msra.mxu0 0
    %665 = vmatprep.subr.bf16.mxu0 0
    %666 = vmatpush1.bf16.msra.mxu0 0
    %667 = vmatprep.mubr.bf16.mxu0 0
    %668 = vmatmul.mubr.bf16.gmra.mrb[0].mxu0 %v169
    %v669 = vpop.f32.mrb[0].mxu0
    %v670 = vadd.f32 0.0, %v669
    %v671 = vpop.f32.mrb[0].mxu0
    %v672 = vpop.f32.mrb[0].mxu0
    %v673 = vadd.f32 0.0, %v672
    %v674 = vpop.f32.mrb[0].mxu0
    %675 = vmatprep.mubr.bf16.mxu0 0
    %676 = vmatmul.mubr.bf16.gmra.mrb[0].mxu0 %v172
    %v677 = vpop.f32.mrb[0].mxu0
    %v678 = vadd.f32 0.0, %v677
    %v679 = vpop.f32.mrb[0].mxu0
    %v680 = vpop.f32.mrb[0].mxu0
    %v681 = vadd.f32 0.0, %v680
    %v682 = vpop.f32.mrb[0].mxu0
    %683 = vdwg.mxu0
    %v684 = vpack.c.bf16 %v673, %v670
    %v685 = vpack.c.bf16 %v681, %v678
    %v686 = vld [vmem:[#allocation10] sm:$0xf]
    %v687 = vld [vmem:[#allocation10 + $0x4] sm:$0xf]
    %v688 = vld [vmem:[#allocation10 + $0x8] sm:$0xf]
    %v689 = vld [vmem:[#allocation10 + $0xc] sm:$0xf]
    %v690 = vld [vmem:[#allocation10 + $0x10] sm:$0xf]
    %v691 = vld [vmem:[#allocation10 + $0x14] sm:$0xf]
    %v692 = vld [vmem:[#allocation10 + $0x18] sm:$0xf]
    %v693 = vld [vmem:[#allocation10 + $0x1c] sm:$0xf]
    %v694 = vld [vmem:[#allocation10 + $0x20] sm:$0xf]
    %v695 = vld [vmem:[#allocation10 + $0x24] sm:$0xf]
    %v696 = vld [vmem:[#allocation10 + $0x28] sm:$0xf]
    %v697 = vld [vmem:[#allocation10 + $0x2c] sm:$0xf]
    %v698 = vld [vmem:[#allocation10 + $0x30] sm:$0xf]
    %v699 = vld [vmem:[#allocation10 + $0x34] sm:$0xf]
    %v700 = vld [vmem:[#allocation10 + $0x38] sm:$0xf]
    %v701 = vld [vmem:[#allocation10 + $0x3c] sm:$0xf]
    %v718 = vunpack.c.l.b16 %v686
    %v719 = vunpack.c.l.b16 %v687
    %v720 = vunpack.c.l.b16 %v688
    %v721 = vunpack.c.l.b16 %v689
    %v722 = vunpack.c.l.b16 %v690
    %v723 = vunpack.c.l.b16 %v691
    %v724 = vunpack.c.l.b16 %v692
    %v725 = vunpack.c.l.b16 %v693
    %v726 = vunpack.c.l.b16 %v694
    %v727 = vunpack.c.l.b16 %v695
    %v728 = vunpack.c.l.b16 %v696
    %v729 = vunpack.c.l.b16 %v697
    %v730 = vunpack.c.l.b16 %v698
    %v731 = vunpack.c.l.b16 %v699
    %v732 = vunpack.c.l.b16 %v700
    %v733 = vunpack.c.l.b16 %v701
    %v734 = vpack.c.b16 %v719, %v718
    %v735 = vpack.c.b16 %v721, %v720
    %v736 = vpack.c.b16 %v723, %v722
    %v737 = vpack.c.b16 %v725, %v724
    %v738 = vpack.c.b16 %v727, %v726
    %v739 = vpack.c.b16 %v729, %v728
    %v740 = vpack.c.b16 %v731, %v730
    %v741 = vpack.c.b16 %v733, %v732
    %750 = vmatprep.subr.bf16.mxu0 0
    %751 = vmatpush1.bf16.msra.mxu0 %v734
    %752 = vmatprep.subr.bf16.mxu0 0
    %753 = vmatpush1.bf16.msra.mxu0 %v735
    %754 = vmatprep.subr.bf16.mxu0 0
    %755 = vmatpush1.bf16.msra.mxu0 %v736
    %756 = vmatprep.subr.bf16.mxu0 0
    %757 = vmatpush1.bf16.msra.mxu0 %v737
    %758 = vmatprep.subr.bf16.mxu0 0
    %759 = vmatpush1.bf16.msra.mxu0 %v738
    %760 = vmatprep.subr.bf16.mxu0 0
    %761 = vmatpush1.bf16.msra.mxu0 %v739
    %762 = vmatprep.subr.bf16.mxu0 0
    %763 = vmatpush1.bf16.msra.mxu0 %v740
    %764 = vmatprep.subr.bf16.mxu0 0
    %765 = vmatpush1.bf16.msra.mxu0 %v741
    %766 = vmatprep.subr.bf16.mxu0 0
    %767 = vmatpush1.bf16.msra.mxu0 0
    %768 = vmatprep.subr.bf16.mxu0 0
    %769 = vmatpush1.bf16.msra.mxu0 0
    %770 = vmatprep.subr.bf16.mxu0 0
    %771 = vmatpush1.bf16.msra.mxu0 0
    %772 = vmatprep.subr.bf16.mxu0 0
    %773 = vmatpush1.bf16.msra.mxu0 0
    %774 = vmatprep.subr.bf16.mxu0 0
    %775 = vmatpush1.bf16.msra.mxu0 0
    %776 = vmatprep.subr.bf16.mxu0 0
    %777 = vmatpush1.bf16.msra.mxu0 0
    %778 = vmatprep.subr.bf16.mxu0 0
    %779 = vmatpush1.bf16.msra.mxu0 0
    %780 = vmatprep.subr.bf16.mxu0 0
    %781 = vmatpush1.bf16.msra.mxu0 0
    %782 = vmatprep.mubr.bf16.mxu0 0
    %783 = vmatmul.mubr.bf16.gmra.mrb[0].mxu0 %v684
    %v784 = vpop.f32.mrb[0].mxu0
    %v785 = vadd.f32 0.0, %v784
    %v786 = vpop.f32.mrb[0].mxu0
    %v787 = vpop.f32.mrb[0].mxu0
    %v788 = vadd.f32 0.0, %v787
    %v789 = vpop.f32.mrb[0].mxu0
    %790 = vmatprep.mubr.bf16.mxu0 0
    %791 = vmatmul.mubr.bf16.gmra.mrb[0].mxu0 %v685
    %v792 = vpop.f32.mrb[0].mxu0
    %v793 = vadd.f32 0.0, %v792
    %v794 = vpop.f32.mrb[0].mxu0
    %v795 = vpop.f32.mrb[0].mxu0
    %v796 = vadd.f32 0.0, %v795
    %v797 = vpop.f32.mrb[0].mxu0
    %798 = vdwg.mxu0
    %v815 = vunpack.c.l.b16 %v619
    %v816 = vunpack.c.l.b16 %v620
    %v817 = vunpack.c.l.b16 %v621
    %v818 = vunpack.c.l.b16 %v622
    %v819 = vunpack.c.l.b16 %v623
    %v820 = vunpack.c.l.b16 %v624
    %v821 = vunpack.c.l.b16 %v625
    %v822 = vunpack.c.l.b16 %v626
    %v823 = vunpack.c.l.b16 %v627
    %v824 = vunpack.c.l.b16 %v628
    %v825 = vunpack.c.l.b16 %v629
    %v826 = vunpack.c.l.b16 %v630
    %v827 = vunpack.c.l.b16 %v631
    %v828 = vunpack.c.l.b16 %v632
    %v829 = vunpack.c.l.b16 %v633
    %v830 = vunpack.c.l.b16 %v634
    %v831 = vpack.c.b16 %v816, %v815
    %v832 = vpack.c.b16 %v818, %v817
    %v833 = vpack.c.b16 %v820, %v819
    %v834 = vpack.c.b16 %v822, %v821
    %v835 = vpack.c.b16 %v824, %v823
    %v836 = vpack.c.b16 %v826, %v825
    %v837 = vpack.c.b16 %v828, %v827
    %v838 = vpack.c.b16 %v830, %v829
    %847 = vmatprep.subr.bf16.mxu0 0
    %848 = vmatpush1.bf16.msra.mxu0 %v831
    %849 = vmatprep.subr.bf16.mxu0 0
    %850 = vmatpush1.bf16.msra.mxu0 %v832
    %851 = vmatprep.subr.bf16.mxu0 0
    %852 = vmatpush1.bf16.msra.mxu0 %v833
    %853 = vmatprep.subr.bf16.mxu0 0
    %854 = vmatpush1.bf16.msra.mxu0 %v834
    %855 = vmatprep.subr.bf16.mxu0 0
    %856 = vmatpush1.bf16.msra.mxu0 %v835
    %857 = vmatprep.subr.bf16.mxu0 0
    %858 = vmatpush1.bf16.msra.mxu0 %v836
    %859 = vmatprep.subr.bf16.mxu0 0
    %860 = vmatpush1.bf16.msra.mxu0 %v837
    %861 = vmatprep.subr.bf16.mxu0 0
    %862 = vmatpush1.bf16.msra.mxu0 %v838
    %863 = vmatprep.subr.bf16.mxu0 0
    %864 = vmatpush1.bf16.msra.mxu0 0
    %865 = vmatprep.subr.bf16.mxu0 0
    %866 = vmatpush1.bf16.msra.mxu0 0
    %867 = vmatprep.subr.bf16.mxu0 0
    %868 = vmatpush1.bf16.msra.mxu0 0
    %869 = vmatprep.subr.bf16.mxu0 0
    %870 = vmatpush1.bf16.msra.mxu0 0
    %871 = vmatprep.subr.bf16.mxu0 0
    %872 = vmatpush1.bf16.msra.mxu0 0
    %873 = vmatprep.subr.bf16.mxu0 0
    %874 = vmatpush1.bf16.msra.mxu0 0
    %875 = vmatprep.subr.bf16.mxu0 0
    %876 = vmatpush1.bf16.msra.mxu0 0
    %877 = vmatprep.subr.bf16.mxu0 0
    %878 = vmatpush1.bf16.msra.mxu0 0
    %879 = vmatprep.mubr.bf16.mxu0 0
    %880 = vmatmul.mubr.bf16.gmra.mrb[0].mxu0 %v615
    %v881 = vpop.f32.mrb[0].mxu0
    %v882 = vadd.f32 %v785, %v881
    %v883 = vpop.f32.mrb[0].mxu0
    %v884 = vpop.f32.mrb[0].mxu0
    %v885 = vadd.f32 %v788, %v884
    %v886 = vpop.f32.mrb[0].mxu0
    %887 = vmatprep.mubr.bf16.mxu0 0
    %888 = vmatmul.mubr.bf16.gmra.mrb[0].mxu0 %v616
    %v889 = vpop.f32.mrb[0].mxu0
    %v890 = vadd.f32 %v793, %v889
    %v891 = vpop.f32.mrb[0].mxu0
    %v892 = vpop.f32.mrb[0].mxu0
    %v893 = vadd.f32 %v796, %v892
    %v894 = vpop.f32.mrb[0].mxu0
    %895 = vdwg.mxu0
    %896 = vmatprep.subr.bf16.mxu0 0
    %897 = vmatpush1.bf16.msra.mxu0 %v615
    %898 = vmatprep.subr.bf16.mxu0 0
    %899 = vmatpush1.bf16.msra.mxu0 %v616
    %900 = vmatprep.subr.bf16.mxu0 0
    %901 = vmatpush1.bf16.msra.mxu0 0
    %902 = vmatprep.subr.bf16.mxu0 0
    %903 = vmatpush1.bf16.msra.mxu0 0
    %904 = vmatprep.subr.bf16.mxu0 0
    %905 = vmatpush1.bf16.msra.mxu0 0
    %906 = vmatprep.subr.bf16.mxu0 0
    %907 = vmatpush1.bf16.msra.mxu0 0
    %908 = vmatprep.subr.bf16.mxu0 0
    %909 = vmatpush1.bf16.msra.mxu0 0
    %910 = vmatprep.subr.bf16.mxu0 0
    %911 = vmatpush1.bf16.msra.mxu0 0
    %912 = vmatprep.subr.bf16.mxu0 0
    %913 = vmatpush1.bf16.msra.mxu0 0
    %914 = vmatprep.subr.bf16.mxu0 0
    %915 = vmatpush1.bf16.msra.mxu0 0
    %916 = vmatprep.subr.bf16.mxu0 0
    %917 = vmatpush1.bf16.msra.mxu0 0
    %918 = vmatprep.subr.bf16.mxu0 0
    %919 = vmatpush1.bf16.msra.mxu0 0
    %920 = vmatprep.subr.bf16.mxu0 0
    %921 = vmatpush1.bf16.msra.mxu0 0
    %922 = vmatprep.subr.bf16.mxu0 0
    %923 = vmatpush1.bf16.msra.mxu0 0
    %924 = vmatprep.subr.bf16.mxu0 0
    %925 = vmatpush1.bf16.msra.mxu0 0
    %926 = vmatprep.subr.bf16.mxu0 0
    %927 = vmatpush1.bf16.msra.mxu0 0
    %928 = vmatprep.mubr.bf16.mxu0 0
    %929 = vmatmul.mubr.bf16.gmra.mrb[0].mxu0 %v431
    %v930 = vpop.f32.mrb[0].mxu0
    %v931 = vadd.f32 0.0, %v930
    %v932 = vpop.f32.mrb[0].mxu0
    %v933 = vpop.f32.mrb[0].mxu0
    %v934 = vadd.f32 0.0, %v933
    %v935 = vpop.f32.mrb[0].mxu0
    %936 = vmatprep.mubr.bf16.mxu0 0
    %937 = vmatmul.mubr.bf16.gmra.mrb[0].mxu0 %v434
    %v938 = vpop.f32.mrb[0].mxu0
    %v939 = vadd.f32 0.0, %v938
    %v940 = vpop.f32.mrb[0].mxu0
    %v941 = vpop.f32.mrb[0].mxu0
    %v942 = vadd.f32 0.0, %v941
    %v943 = vpop.f32.mrb[0].mxu0
    %944 = vdwg.mxu0
    %v945 = vpack.c.bf16 %v934, %v931
    %v946 = vpack.c.bf16 %v942, %v939
    %s947 = scalar_lea.vmem [#allocation10], 128
    %v948 = vld [vmem:[%s947] sm:$0xf]
    %v949 = vld [vmem:[%s947 + $0x4] sm:$0xf]
    %v950 = vld [vmem:[%s947 + $0x8] sm:$0xf]
    %v951 = vld [vmem:[%s947 + $0xc] sm:$0xf]
    %v952 = vld [vmem:[%s947 + $0x10] sm:$0xf]
    %v953 = vld [vmem:[%s947 + $0x14] sm:$0xf]
    %v954 = vld [vmem:[%s947 + $0x18] sm:$0xf]
    %v955 = vld [vmem:[%s947 + $0x1c] sm:$0xf]
    %v956 = vld [vmem:[%s947 + $0x20] sm:$0xf]
    %v957 = vld [vmem:[%s947 + $0x24] sm:$0xf]
    %v958 = vld [vmem:[%s947 + $0x28] sm:$0xf]
    %v959 = vld [vmem:[%s947 + $0x2c] sm:$0xf]
    %v960 = vld [vmem:[%s947 + $0x30] sm:$0xf]
    %v961 = vld [vmem:[%s947 + $0x34] sm:$0xf]
    %v962 = vld [vmem:[%s947 + $0x38] sm:$0xf]
    %v963 = vld [vmem:[%s947 + $0x3c] sm:$0xf]
    %v980 = vunpack.c.l.b16 %v948
    %v981 = vunpack.c.l.b16 %v949
    %v982 = vunpack.c.l.b16 %v950
    %v983 = vunpack.c.l.b16 %v951
    %v984 = vunpack.c.l.b16 %v952
    %v985 = vunpack.c.l.b16 %v953
    %v986 = vunpack.c.l.b16 %v954
    %v987 = vunpack.c.l.b16 %v955
    %v988 = vunpack.c.l.b16 %v956
    %v989 = vunpack.c.l.b16 %v957
    %v990 = vunpack.c.l.b16 %v958
    %v991 = vunpack.c.l.b16 %v959
    %v992 = vunpack.c.l.b16 %v960
    %v993 = vunpack.c.l.b16 %v961
    %v994 = vunpack.c.l.b16 %v962
    %v995 = vunpack.c.l.b16 %v963
    %v996 = vpack.c.b16 %v981, %v980
    %v997 = vpack.c.b16 %v983, %v982
    %v998 = vpack.c.b16 %v985, %v984
    %v999 = vpack.c.b16 %v987, %v986
    %v1000 = vpack.c.b16 %v989, %v988
    %v1001 = vpack.c.b16 %v991, %v990
    %v1002 = vpack.c.b16 %v993, %v992
    %v1003 = vpack.c.b16 %v995, %v994
    %1012 = vmatprep.subr.bf16.mxu0 0
    %1013 = vmatpush1.bf16.msra.mxu0 %v996
    %1014 = vmatprep.subr.bf16.mxu0 0
    %1015 = vmatpush1.bf16.msra.mxu0 %v997
    %1016 = vmatprep.subr.bf16.mxu0 0
    %1017 = vmatpush1.bf16.msra.mxu0 %v998
    %1018 = vmatprep.subr.bf16.mxu0 0
    %1019 = vmatpush1.bf16.msra.mxu0 %v999
    %1020 = vmatprep.subr.bf16.mxu0 0
    %1021 = vmatpush1.bf16.msra.mxu0 %v1000
    %1022 = vmatprep.subr.bf16.mxu0 0
    %1023 = vmatpush1.bf16.msra.mxu0 %v1001
    %1024 = vmatprep.subr.bf16.mxu0 0
    %1025 = vmatpush1.bf16.msra.mxu0 %v1002
    %1026 = vmatprep.subr.bf16.mxu0 0
    %1027 = vmatpush1.bf16.msra.mxu0 %v1003
    %1028 = vmatprep.subr.bf16.mxu0 0
    %1029 = vmatpush1.bf16.msra.mxu0 0
    %1030 = vmatprep.subr.bf16.mxu0 0
    %1031 = vmatpush1.bf16.msra.mxu0 0
    %1032 = vmatprep.subr.bf16.mxu0 0
    %1033 = vmatpush1.bf16.msra.mxu0 0
    %1034 = vmatprep.subr.bf16.mxu0 0
    %1035 = vmatpush1.bf16.msra.mxu0 0
    %1036 = vmatprep.subr.bf16.mxu0 0
    %1037 = vmatpush1.bf16.msra.mxu0 0
    %1038 = vmatprep.subr.bf16.mxu0 0
    %1039 = vmatpush1.bf16.msra.mxu0 0
    %1040 = vmatprep.subr.bf16.mxu0 0
    %1041 = vmatpush1.bf16.msra.mxu0 0
    %1042 = vmatprep.subr.bf16.mxu0 0
    %1043 = vmatpush1.bf16.msra.mxu0 0
    %1044 = vmatprep.mubr.bf16.mxu0 0
    %1045 = vmatmul.mubr.bf16.gmra.mrb[0].mxu0 %v945
    %v1046 = vpop.f32.mrb[0].mxu0
    %v1047 = vadd.f32 0.0, %v1046
    %v1048 = vpop.f32.mrb[0].mxu0
    %v1049 = vpop.f32.mrb[0].mxu0
    %v1050 = vadd.f32 0.0, %v1049
    %v1051 = vpop.f32.mrb[0].mxu0
    %1052 = vmatprep.mubr.bf16.mxu0 0
    %1053 = vmatmul.mubr.bf16.gmra.mrb[0].mxu0 %v946
    %v1054 = vpop.f32.mrb[0].mxu0
    %v1055 = vadd.f32 0.0, %v1054
    %v1056 = vpop.f32.mrb[0].mxu0
    %v1057 = vpop.f32.mrb[0].mxu0
    %v1058 = vadd.f32 0.0, %v1057
    %v1059 = vpop.f32.mrb[0].mxu0
    %1060 = vdwg.mxu0
    %v1061 = vadd.f32 %v882, %v1047
    %v1062 = vadd.f32 %v885, %v1050
    %v1063 = vadd.f32 %v890, %v1055
    %v1064 = vadd.f32 %v893, %v1058
    %v1065 = vlaneseq
    %v1066 = vshrl.u32 %v1065, 7
    %v1067 = vsub.s32 0, %v1066
    %v1068 = vrot.slane %v617, %v1067
    %v1069 = vmul.f32 %v1061, %v1068
    %v1070 = vmul.f32 %v1062, %v1068
    %v1071 = vmul.f32 %v1063, %v1068
    %v1072 = vmul.f32 %v1064, %v1068
    %v1073 = vlaneseq
    %v1074 = vshrl.u32 %v1073, 7
    %v1075 = vsub.s32 1, %v1074
    %v1076 = vrot.slane %v617, %v1075
    %v1077 = vadd.f32 %v1069, %v1076
    %v1078 = vadd.f32 %v1070, %v1076
    %v1079 = vadd.f32 %v1071, %v1076
    %v1080 = vadd.f32 %v1072, %v1076
    %v1081 = vmax.f32 %v1077, 0.0
    %v1082 = vmax.f32 %v1078, 0.0
    %v1083 = vmax.f32 %v1079, 0.0
    %v1084 = vmax.f32 %v1080, 0.0
    %1085 = vst [vmem:[#allocation14] sm:$0xff] %v1081
    %1086 = vst [vmem:[#allocation14 + $0x8] sm:$0xff] %v1082
    %1087 = vst [vmem:[#allocation14 + $0x10] sm:$0xff] %v1083
    %1088 = vst [vmem:[#allocation14 + $0x18] sm:$0xff] %v1084
    // Predicated region
    $region58: #{decoder_block_forward.1} parent=1 // pred_check
      _
    $region59: #{decoder_block_forward.1} parent=1 // pred_check_branch
      %1090 = sbr.rel (0) target = $region61
    $region60: #{decoder_block_forward.1} parent=1 // pred_region
      %s1092 = ssub.s32 512, 512
      %1093 = vsyncadd [#allocation4], %s1092
      %s1094 = sshll.u32 [#allocation14], 4
      %s1095 = int_to_ptr.vmem [resolvable:$true] %s1094
      %1100 = dma.vmem_to_hbm [thread:$0]  %s1095, 512, %s7, [#allocation4], 128, 128, 8
    $region61: #{decoder_block_forward.1} parent=1 // pred_fallthru
      _
    // Predicated region
    $region62: #{decoder_block_forward.1} parent=1 // pred_check
      _
    $region63: #{decoder_block_forward.1} parent=1 // pred_check_branch
      %1102 = sbr.rel (0) target = $region65
    $region64: #{decoder_block_forward.1} parent=1 // pred_region
      %1103 = dma.done [#allocation4], 512
    $region65: #{decoder_block_forward.1} parent=1 // pred_fallthru
      _
    %1104 = vsyncpa [#allocation3], 1
    %1105 = vsyncpa [#allocation6], 1
    %1106 = vsyncpa [#allocation9], 1
    %1107 = vsyncpa [#allocation12], 1
    %1108 = vsyncpa [#allocation4], 1

</llo_original>
